<compile_context>
chip_gen: v7x
topology: tpu7x:2x2x1
jax: 0.10.0
libtpu: 0.0.40
codegen_flags: <defaults>
</compile_context>

<pallas_src>
import functools

import jax
import jax.numpy as jnp
from jax.experimental import pallas as pl
from jax.experimental.pallas import tpu as pltpu

_MiB = 1024 * 1024


def _round_up(a, b):
    return (a + b - 1) // b * b


def _vmem_capacity_bytes():
    """Physical VMEM of the current TPU generation (conservative fallback)."""
    try:
        return int(pltpu.get_tpu_info().vmem_capacity_bytes)
    except Exception:
        return 64 * _MiB  # v7x per-TensorCore VMEM (smallest of v5e/v6e/v7x)


def _sublane_multiple(itemsize):
    # Sublane packing: 8 rows for 32-bit, 16 for 16-bit, 32 for 8-bit dtypes.
    return {4: 8, 2: 16, 1: 32}.get(itemsize, 8)


def _tile_candidates(C, H, sub):
    # TODO(synk): allow non-divisor tiles via pl.cdiv grids so prime-ish C/H
    # don't collapse to tiny tiles / sub-512B DMA bursts.
    th_cands = sorted({d for d in range(sub, H + 1, sub) if H % d == 0} | {H})
    tc_cands = sorted(d for d in range(1, C + 1) if C % d == 0)
    return tc_cands, th_cands


def _choose_tiles(C, H, W, sh, sw, itemsize, sub, out_block_budget):
    """Largest (tc, th) whose *physical* output block fits the VMEM budget."""
    lane_out = _round_up(sh * W * sw, 128)          # lane padding to 128
    tc_cands, th_cands = _tile_candidates(C, H, sub)
    best_key, best = None, None
    for th in th_cands:
        rows = _round_up(th, sub)
        for tc in tc_cands:
            phys_out = tc * rows * lane_out * itemsize
            if phys_out > out_block_budget:
                continue
            key = (phys_out, th, tc)
            if best_key is None or key > best_key:
                best_key, best = key, (tc, th)
    if best is None:
        # Nothing fits (extreme W): smallest legal tile, vmem_limit stretches.
        # TODO(synk): split along W with a fourth grid axis for extreme widths.
        best = (tc_cands[0], th_cands[0])
    return best


def _split_for_occupancy(N, C, H, tc, th, sub, min_steps=8):
    """Shrink tiles until the grid has enough steps for both v7x TensorCores."""
    tc_cands, th_cands = _tile_candidates(C, H, sub)
    while N * (C // tc) * (H // th) < min_steps:
        smaller_tc = [d for d in tc_cands if d < tc]
        smaller_th = [d for d in th_cands if d < th]
        # Split the dimension that currently has fewer blocks (keeps balance);
        # prefer channels so the per-channel contiguous DMA run stays long.
        if smaller_tc and (not smaller_th or (C // tc) <= (H // th)):
            tc = smaller_tc[-1]
        elif smaller_th:
            th = smaller_th[-1]
        else:
            break
    return tc, th


def _upsample_kernel(x_ref, o_ref, *, sh, sw):
    xv = x_ref[0]                        # (tc, th, W)
    tc, th, w = xv.shape
    wo = w * sw

    # Width (lane-axis) replication: y[..., j] = x[..., j // sw].  This lane
    # interleave only processes input-sized data, i.e. 1/(sh*sw) of the output.
    # (Only swap this for an MXU replication-matrix matmul if a bundle dump
    # shows it as the binding slot -- and then f32 needs precision=HIGHEST.)
    if sw > 1:
        y = jnp.broadcast_to(xv[:, :, :, None], (tc, th, w, sw)).reshape(tc, th, wo)
    else:
        y = xv

    # Height replication is also a *lane*-axis tile thanks to the wrapper-side
    # (N, C, H, sh*Wo) output view: each stored row holds its sh replicated
    # output rows back-to-back, so there is no sublane interleave and the
    # block is written with a single dense, lane-wide store.
    if sh > 1:
        y = jnp.broadcast_to(y[:, :, None, :], (tc, th, sh, wo)).reshape(tc, th, sh * wo)

    o_ref[0] = y.astype(o_ref.dtype)


def upsample_nearest_nchw(x, scale_factor=2, size=None, *, tile_c=None, tile_h=None):
    """Nearest-neighbor upsampling of an NCHW tensor with integer scale factors."""
    assert x.ndim == 4, f"expected NCHW input, got shape {x.shape}"
    # TODO(synk): 5-D NCDHW inputs (2.5-D UNet) and 'linear'/'bilinear'/
    # 'trilinear' modes are not implemented; only nearest on NCHW.
    N, C, H, W = x.shape

    if size is not None:
        if isinstance(size, int):
            size = (size, size)
        Ho_req, Wo_req = size
        if Ho_req % H or Wo_req % W:
            # TODO(synk): general `size=` / non-integer scales need
            # floor(i*H_in/H_out) source indexing (a gather).
            raise NotImplementedError("size must be an integer multiple of the input")
        sh, sw = Ho_req // H, Wo_req // W
    else:
        if scale_factor is None:
            raise ValueError("either size or scale_factor must be provided")
        if isinstance(scale_factor, (tuple, list)):
            sh, sw = scale_factor
        else:
            sh = sw = scale_factor
        if int(sh) != sh or int(sw) != sw:
            raise NotImplementedError("only integer scale factors are supported")
        sh, sw = int(sh), int(sw)

    if sh == 1 and sw == 1:
        return x

    Ho, Wo = H * sh, W * sw
    itemsize = jnp.dtype(x.dtype).itemsize
    sub = _sublane_multiple(itemsize)

    # --- VMEM budgeting / tile selection -------------------------------------
    cap = _vmem_capacity_bytes()
    # 16 MiB output blocks on 128 MiB parts (v5e/v6e), 8 MiB on v7x (64 MiB).
    out_budget = min(cap // 8, (16 if cap >= 96 * _MiB else 8) * _MiB)
    tc, th = _choose_tiles(C, H, W, sh, sw, itemsize, sub, out_budget)
    tc, th = _split_for_occupancy(N, C, H, tc, th, sub)

    if tile_c is not None:
        if C % tile_c:
            raise ValueError(f"tile_c={tile_c} must divide C={C}")
        tc = int(tile_c)
    if tile_h is not None:
        if H % tile_h or (tile_h % sub and tile_h != H):
            raise ValueError(
                f"tile_h={tile_h} must divide H={H} and be a multiple of {sub} "
                f"(or equal H) for dtype {x.dtype}")
        th = int(tile_h)

    # Physical (padded) block bytes: sublane rows to `sub`, lane dim to 128.
    rows = _round_up(th, sub)
    in_phys = tc * rows * _round_up(W, 128) * itemsize
    out_phys = tc * rows * _round_up(sh * Wo, 128) * itemsize
    deep_input_pipeline = cap <= 80 * _MiB          # v7x-sized VMEM
    in_bufs = 3 if deep_input_pipeline else 2
    # +1 out_phys headroom for a possible relayout temp of the store value.
    need = in_bufs * in_phys + 2 * out_phys + out_phys
    vmem_limit = min(int(cap * 0.85),
                     max(32 * _MiB, int(need * 1.5) + 4 * _MiB))

    grid = (N, C // tc, H // th)

    # The kernel writes an (N, C, H, sh*Wo) view of the output; reshaping it to
    # (N, C, Ho, Wo) afterwards is a free row-major reinterpretation, because
    # flat index h*(sh*Wo) + r*Wo + j == (h*sh + r)*Wo + j.
    def _run(in_pipeline_mode):
        if in_pipeline_mode is None:
            in_spec = pl.BlockSpec((1, tc, th, W), lambda n, ci, hi: (n, ci, hi, 0))
        else:
            in_spec = pl.BlockSpec((1, tc, th, W), lambda n, ci, hi: (n, ci, hi, 0),
                                   pipeline_mode=in_pipeline_mode)
        return pl.pallas_call(
            functools.partial(_upsample_kernel, sh=sh, sw=sw),
            out_shape=jax.ShapeDtypeStruct((N, C, H, sh * Wo), x.dtype),
            grid=grid,
            in_specs=[in_spec],
            out_specs=pl.BlockSpec((1, tc, th, sh * Wo),
                                   lambda n, ci, hi: (n, ci, hi, 0)),
            compiler_params=pltpu.CompilerParams(
                dimension_semantics=("parallel", "parallel", "parallel"),
                vmem_limit_bytes=vmem_limit,
            ),
        )(x)

    if deep_input_pipeline:
        # Input stream is only 1/(sh*sw) of the output -> 3-deep pipelining is
        # nearly free in VMEM and hides DMA-issue latency on v7x.
        try:
            out = _run(pl.Buffered(3))
        except Exception:  # pipeline_mode support varies across jax versions
            out = _run(None)
    else:
        out = _run(None)

    return out.reshape(N, C, Ho, Wo)


def upsample_nearest_reference(x, scale_factor=2):
    """Plain-JAX reference matching F.interpolate(mode='nearest')."""
    if isinstance(scale_factor, (tuple, list)):
        sh, sw = scale_factor
    else:
        sh = sw = scale_factor
    y = jnp.repeat(x, int(sh), axis=2)
    return jnp.repeat(y, int(sw), axis=3)


if __name__ == "__main__":
    keys = jax.random.split(jax.random.PRNGKey(0), 4)

    # Primary case (module spec): Upsample(scale_factor=2, mode='nearest').
    x = jax.random.normal(keys[0], (2, 4, 16, 16), dtype=jnp.float32)
    out = jax.block_until_ready(upsample_nearest_nchw(x, scale_factor=2))
    ref = upsample_nearest_reference(x, scale_factor=2)
    assert out.shape == (2, 4, 32, 32), out.shape
    assert jnp.array_equal(out, ref), "mismatch (f32, scale 2)"

    # Multi-block tiling path (grid over N, C-tiles, H-tiles) + anisotropic scale.
    x2 = jax.random.normal(keys[1], (2, 8, 32, 64), dtype=jnp.float32)
    out2 = jax.block_until_ready(
        upsample_nearest_nchw(x2, scale_factor=(2, 3), tile_c=4, tile_h=8))
    assert jnp.array_equal(out2, upsample_nearest_reference(x2, (2, 3))), \
        "mismatch (f32, tiled, scale (2,3))"

    # bf16 path (16-row sublane packing) with H tiling.
    x3 = jax.random.normal(keys[2], (1, 4, 32, 32), dtype=jnp.bfloat16)
    out3 = jax.block_until_ready(
        upsample_nearest_nchw(x3, scale_factor=2, tile_h=16))
    assert jnp.array_equal(out3, upsample_nearest_reference(x3, 2)), \
        "mismatch (bf16, tiled, scale 2)"

    # Anisotropic scale with sw == 1 (height-only replication branch).
    x4 = jax.random.normal(keys[3], (1, 2, 8, 16), dtype=jnp.float32)
    out4 = jax.block_until_ready(upsample_nearest_nchw(x4, scale_factor=(3, 1)))
    assert jnp.array_equal(out4, upsample_nearest_reference(x4, (3, 1))), \
        "mismatch (f32, scale (3,1))"

    print("KERNEL_OK")
</pallas_src>

<mosaic_0001>
module attributes {stable_mosaic.version = 11 : i64} {
  func.func @_upsample_kernel(%arg0: i32, %arg1: i32, %arg2: i32, %arg3: memref<1x2x8x16xf32, #tpu.memory_space<vmem>>, %arg4: memref<1x2x8x64xf32, #tpu.memory_space<vmem>>) attributes {dimension_semantics = [#tpu.dimension_semantics<parallel>, #tpu.dimension_semantics<parallel>, #tpu.dimension_semantics<parallel>], iteration_bounds = array<i64: 2, 2, 2>, scalar_prefetch = 0 : i64, scratch_operands = 0 : i64, tpu.core_type = #tpu.core_type<tc>, window_params = [{transform_indices = @transform_0, window_bounds = array<i64: 1, 2, 8, 16>}, {transform_indices = @transform_1, window_bounds = array<i64: 1, 2, 8, 64>}]} {
    %c0 = arith.constant 0 : index
    %c0_0 = arith.constant 0 : index
    %c0_1 = arith.constant 0 : index
    %c0_2 = arith.constant 0 : index
    %0 = vector.load %arg3[%c0, %c0_0, %c0_1, %c0_2] : memref<1x2x8x16xf32, #tpu.memory_space<vmem>>, vector<1x2x8x16xf32>
    %1 = vector.shape_cast %0 : vector<1x2x8x16xf32> to vector<2x8x16xf32>
    %2 = vector.shape_cast %1 : vector<2x8x16xf32> to vector<2x8x16x1xf32>
    %3 = vector.shape_cast %2 : vector<2x8x16x1xf32> to vector<2x8x16x1xf32>
    %4 = vector.broadcast %3 : vector<2x8x16x1xf32> to vector<2x8x16x2xf32>
    %5 = vector.shape_cast %4 : vector<2x8x16x2xf32> to vector<2x8x32xf32>
    %6 = vector.shape_cast %5 : vector<2x8x32xf32> to vector<2x8x1x32xf32>
    %7 = vector.shape_cast %6 : vector<2x8x1x32xf32> to vector<2x8x1x32xf32>
    %8 = vector.broadcast %7 : vector<2x8x1x32xf32> to vector<2x8x2x32xf32>
    %9 = vector.shape_cast %8 : vector<2x8x2x32xf32> to vector<2x8x64xf32>
    %c0_3 = arith.constant 0 : index
    %c0_4 = arith.constant 0 : index
    %c0_5 = arith.constant 0 : index
    %c0_6 = arith.constant 0 : index
    %10 = vector.load %arg4[%c0_3, %c0_4, %c0_5, %c0_6] : memref<1x2x8x64xf32, #tpu.memory_space<vmem>>, vector<1x2x8x64xf32>
    %11 = vector.shape_cast %10 : vector<1x2x8x64xf32> to vector<2x8x64xf32>
    %12 = vector.shape_cast %9 : vector<2x8x64xf32> to vector<1x2x8x64xf32>
    tpu.vector_store %arg4[%c0_3, %c0_4, %c0_5, %c0_6], %12 {strides = array<i32>} : memref<1x2x8x64xf32, #tpu.memory_space<vmem>>, vector<1x2x8x64xf32>,
    return
  }
  func.func @transform_0(%arg0: i32, %arg1: i32, %arg2: i32) -> (i32, i32, i32, i32) {
    %c0_i32 = arith.constant 0 : i32
    %c0_i32_0 = arith.constant 0 : i32
    return %arg0, %arg1, %arg2, %c0_i32 : i32, i32, i32, i32
  }
  func.func @transform_1(%arg0: i32, %arg1: i32, %arg2: i32) -> (i32, i32, i32, i32) {
    %c0_i32 = arith.constant 0 : i32
    %c0_i32_0 = arith.constant 0 : i32
    return %arg0, %arg1, %arg2, %c0_i32 : i32, i32, i32, i32
  }
}

</mosaic_0001>

<llo_original>
// kernel: tpu_custom_call.1
$region0: #{tpu_custom_call.1}
  #allocation0 [shape = 'u32[]', space=smem, size = 0x4, offset = 0x4, fixed_abs, tag = 'smem constant byte address 0x4 - core index']
  #allocation1 [shape = 'u32[144,128]{1,0:T(1,128)}', space=vmem, size = 0x12000, scoped, tag = 'internal scratch']
  %s0 = inlined_call_operand.hbm [shape: f32[2,4,16,16], index: 0, kind: input, shape index: {}]
  %s1 = inlined_call_operand.hbm [shape: f32[2,4,16,64], index: 1, kind: output, shape index: {}]
  %s2 = sld [smem:[#allocation0]]
  $region41: #{tpu_custom_call.1} parent=0
    _
  %s4 = ssub.s32 1, %s2
  %s5 = scalar_select 0, %s4, %s2
  $region1: #{tpu_custom_call.1} parent=0
    #allocation2 [shape = 'u8[16384]{0}', space=vmem, size = 0x4000, scoped, tag = 'input window, operand 0']
    #allocation3 [shape = 's32[2]{0}', space=sflag, size = 0x8, scoped, tag = 'scoped memory for tpu_custom_call.1']
    #allocation4 [shape = 's32[2]{0}', space=sflag, size = 0x8, scoped, tag = 'scoped memory for tpu_custom_call.1']
    #allocation5 [shape = 'u8[16384]{0}', space=vmem, size = 0x4000, scoped, tag = 'output window, operand 0']
    %6 = vsyncpa [#allocation3], 0
    %s7 = scalar_lea.sflag [#allocation3], 1
    %8 = vsyncpa %s7, 0
    %9 = vsyncpa [#allocation4], 0
    %s10 = scalar_lea.sflag [#allocation4], 1
    %11 = vsyncpa %s10, 0
    loop: start=0, step=1, limit=10
    $region2: #{tpu_custom_call.1} parent=1 // loop_pre_header
      _
    $region3: #{tpu_custom_call.1} parent=1 // loop_header
      %s13 = sphi 0, %s17
      %p14 = scmp.ge.s32.totalorder %s13, 10
      %s20 = sphi 0, %s39
      %s21 = sphi 0, %s35
      %s22 = sphi 0, %s31
      %s23 = sphi 0, %s20
      %s24 = sphi 0, %s21
      %s25 = sphi 0, %s22
      %s26 = sphi 0, %s23
      %s27 = sphi 0, %s24
      %s28 = sphi 0, %s25
      %s46 = sphi 0, %s48
      %s49 = sphi 0, %s46
      %s50 = sphi 0, %s49
      %s66 = sphi 0, %s50
      %s76 = sphi 0, %s78
      %s79 = sphi 0, %s76
      %s80 = sphi 0, %s79
      %s96 = sphi 0, %s80
    $region4: #{tpu_custom_call.1} parent=1 // loop_header_branch
      %16 = sbr.rel (%p14) target = $region8
    $region5: #{tpu_custom_call.1} parent=1 // loop_body
      %s18 = ssub.s32 %s13, 1
      %s19 = ssub.s32 %s13, 2
      %s29 = sadd.s32 1, %s22
      %p30 = scmp.ge.s32.totalorder %s29, 2
      %s31 = scalar_select %p30, 0, %s29
      %s32 = sadd.s32 1, %s21
      %s33 = scalar_select %p30, %s32, %s21
      %p34 = scmp.ge.s32.totalorder %s33, 2
      %s35 = scalar_select %p34, 0, %s33
      %s36 = sadd.s32 1, %s20
      %s37 = scalar_select %p34, %s36, %s20
      %p38 = scmp.ge.s32.totalorder %s37, 2
      %s39 = scalar_select %p38, 0, %s37
      %s40 = ssub.s32 %s20, %s39
      %s41 = ssub.s32 %s21, %s35
      %s42 = sor.u32 %s40, %s41
      %s43 = ssub.s32 %s22, %s31
      %s44 = sor.u32 %s42, %s43
      %p45 = scmp.eq.s32.totalorder %s44, 0
      %s47 = sadd.s32 %s46, 1
      %s48 = scalar_select %p45, %s46, %s47
      %p51 = pneg %p45
      %p52 = scmp.eq.s32.totalorder %s13, 7
      %p53 = por %p51, %p52
      %p54 = scmp.ne.s32.totalorder %s46, %s49
      %p55 = scmp.eq.s32.totalorder %s13, 0
      %p56 = por %p54, %p55
      %p57 = scmp.ne.s32.totalorder %s46, %s49
      %p58 = scmp.eq.s32.totalorder %s18, 7
      %p59 = por %p57, %p58
      %p60 = scmp.ne.s32.totalorder %s49, %s50
      %p61 = scmp.eq.s32.totalorder %s18, 0
      %p62 = por %p60, %p61
      %p63 = scmp.ne.s32.totalorder %s49, %s50
      %p64 = scmp.eq.s32.totalorder %s19, 7
      %p65 = por %p63, %p64
      %p67 = scmp.ne.s32.totalorder %s50, %s66
      %p68 = scmp.eq.s32.totalorder %s19, 0
      %p69 = por %p67, %p68
      %s70 = ssub.s32 %s20, %s39
      %s71 = ssub.s32 %s21, %s35
      %s72 = sor.u32 %s70, %s71
      %s73 = ssub.s32 %s22, %s31
      %s74 = sor.u32 %s72, %s73
      %p75 = scmp.eq.s32.totalorder %s74, 0
      %s77 = sadd.s32 %s76, 1
      %s78 = scalar_select %p75, %s76, %s77
      %p81 = pneg %p75
      %p82 = scmp.eq.s32.totalorder %s13, 7
      %p83 = por %p81, %p82
      %p84 = scmp.ne.s32.totalorder %s76, %s79
      %p85 = scmp.eq.s32.totalorder %s13, 0
      %p86 = por %p84, %p85
      %p87 = scmp.ne.s32.totalorder %s76, %s79
      %p88 = scmp.eq.s32.totalorder %s18, 7
      %p89 = por %p87, %p88
      %p90 = scmp.ne.s32.totalorder %s79, %s80
      %p91 = scmp.eq.s32.totalorder %s18, 0
      %p92 = por %p90, %p91
      %p93 = scmp.ne.s32.totalorder %s79, %s80
      %p94 = scmp.eq.s32.totalorder %s19, 7
      %p95 = por %p93, %p94
      %p97 = scmp.ne.s32.totalorder %s80, %s96
      %p98 = scmp.eq.s32.totalorder %s19, 0
      %p99 = por %p97, %p98
      %p100 = scmp.le.s32.totalorder 1, %s13
      %p101 = scmp.lt.s32.totalorder %s13, 9
      %p102 = pnand %p100, %p101
      %p103 = pneg %p102
      // Predicated region
      $region9: #{tpu_custom_call.1} parent=5 // pred_check
        _
      $region10: #{tpu_custom_call.1} parent=5 // pred_check_branch
        %105 = sbr.rel (%p102) target = $region12
      $region11: #{tpu_custom_call.1} parent=5 // pred_region
        %s106 = ssub.s32 %s13, 1
      $region12: #{tpu_custom_call.1} parent=5 // pred_fallthru
        _
      %p107 = scmp.lt.s32.totalorder %s13, 8
      // Predicated region
      $region13: #{tpu_custom_call.1} parent=5 // pred_check
        %p108 = pneg %p107
      $region14: #{tpu_custom_call.1} parent=5 // pred_check_branch
        %110 = sbr.rel (%p108) target = $region16
      $region15: #{tpu_custom_call.1} parent=5 // pred_region
        // Predicated region
        $region17: #{tpu_custom_call.1} parent=15 // pred_check
          %p111 = pneg %p56
        $region18: #{tpu_custom_call.1} parent=15 // pred_check_branch
          %113 = sbr.rel (%p111) target = $region20
        $region19: #{tpu_custom_call.1} parent=15 // pred_region
          %s114 = sand.u32 %s46, 1
          %s115 = scalar_lea.sflag [#allocation3], %s114
          %s116 = sand.u32 %s46, 1
          %s117 = smul.addr %s116, 16
          %s118 = scalar_lea.vmem [#allocation2], %s117
          %s119 = smul.u32 2, %s21
          %s121 = ssub.s32 256, 256
          %122 = vsyncadd %s115, %s121
          %s123 = smul.addr %s119, 2
          %s124 = sadd.s32 %s22, %s123
          %s125 = smul.addr %s20, 8
          %s126 = sadd.s32 %s124, %s125
          %s127 = smul.addr %s126, 128
          %s128 = scalar_lea.hbm %s0, %s127
          %s129 = sshll.u32 %s118, 4
          %s130 = int_to_ptr.vmem [resolvable:$true] %s129
          %135 = dma.hbm_to_vmem [thread:$0]  %s128, 256, %s130, %s115, 256, 128, 8
        $region20: #{tpu_custom_call.1} parent=15 // pred_fallthru
          _
      $region16: #{tpu_custom_call.1} parent=5 // pred_fallthru
        _
      %p136 = scmp.le.s32.totalorder 1, %s13
      %p137 = scmp.lt.s32.totalorder %s13, 9
      %p138 = pnand %p136, %p137
      %p139 = pneg %p138
      // Predicated region
      $region21: #{tpu_custom_call.1} parent=5 // pred_check
        _
      $region22: #{tpu_custom_call.1} parent=5 // pred_check_branch
        %141 = sbr.rel (%p138) target = $region24
      $region23: #{tpu_custom_call.1} parent=5 // pred_region
        %s142 = ssub.s32 %s13, 1
        %s143 = sand.u32 %s49, 1
        %s144 = scalar_lea.sflag [#allocation3], %s143
        %s145 = sand.u32 %s49, 1
        %s146 = smul.addr %s145, 16
        %s147 = scalar_lea.vmem [#allocation2], %s146
        // Predicated region
        $region25: #{tpu_custom_call.1} parent=23 // pred_check
          %p148 = pneg %p62
        $region26: #{tpu_custom_call.1} parent=23 // pred_check_branch
          %150 = sbr.rel (%p148) target = $region28
        $region27: #{tpu_custom_call.1} parent=23 // pred_region
          %151 = dma.done %s144, 256
        $region28: #{tpu_custom_call.1} parent=23 // pred_fallthru
          _
        %s152 = sand.u32 %s49, 1
        %s153 = scalar_lea.sflag [#allocation3], %s152
        %s154 = sand.u32 %s49, 1
        %s155 = smul.addr %s154, 16
        %s156 = scalar_lea.vmem [#allocation2], %s155
        %p157 = pneg %p62
        %p158 = pneg %p59
        %p159 = pneg %p92
        %p160 = pneg %p89
        %s161 = sand.u32 %s79, 1
        %s162 = scalar_lea.sflag [#allocation4], %s161
        %s163 = sand.u32 %s79, 1
        %s164 = smul.addr %s163, 16
        %s165 = scalar_lea.vmem [#allocation5], %s164
        %s166 = smul.u32 2, %s24
        %s167 = smul.u32 2, %s24
        %v168 = vld [vmem:[%s147] sm:$0xff]
        %v169 = vld [vmem:[%s147 + $0x8] sm:$0xff]
        %v170 = vlaneseq
        %v171 = vshrl.u32 %v170, 7
        %v172 = vsub.s32 0, %v171
        %v173 = vrot.slane %v168, %v172
        %175 = vbcast.lane.b32.xlu0 %v173, 256
        %v176 = vpop.permute.xlu0 %175
        %s178 = sor.u32 256, 8
        %179 = vbcast.lane.b32.xlu0 %v173, %s178
        %v180 = vpop.permute.xlu0 %179
        %v181 = vlaneseq
        %v182 = vshrl.u32 %v181, 7
        %v183 = vsub.s32 1, %v182
        %v184 = vrot.slane %v168, %v183
        %186 = vbcast.lane.b32.xlu0 %v184, 256
        %v187 = vpop.permute.xlu0 %186
        %s189 = sor.u32 256, 8
        %190 = vbcast.lane.b32.xlu0 %v184, %s189
        %v191 = vpop.permute.xlu0 %190
        %v192 = vlaneseq
        %v193 = vshrl.u32 %v192, 7
        %v194 = vsub.s32 2, %v193
        %v195 = vrot.slane %v168, %v194
        %197 = vbcast.lane.b32.xlu0 %v195, 256
        %v198 = vpop.permute.xlu0 %197
        %s200 = sor.u32 256, 8
        %201 = vbcast.lane.b32.xlu0 %v195, %s200
        %v202 = vpop.permute.xlu0 %201
        %v203 = vlaneseq
        %v204 = vshrl.u32 %v203, 7
        %v205 = vsub.s32 3, %v204
        %v206 = vrot.slane %v168, %v205
        %208 = vbcast.lane.b32.xlu0 %v206, 256
        %v209 = vpop.permute.xlu0 %208
        %s211 = sor.u32 256, 8
        %212 = vbcast.lane.b32.xlu0 %v206, %s211
        %v213 = vpop.permute.xlu0 %212
        %v214 = vlaneseq
        %v215 = vshrl.u32 %v214, 7
        %v216 = vsub.s32 4, %v215
        %v217 = vrot.slane %v168, %v216
        %219 = vbcast.lane.b32.xlu0 %v217, 256
        %v220 = vpop.permute.xlu0 %219
        %s222 = sor.u32 256, 8
        %223 = vbcast.lane.b32.xlu0 %v217, %s222
        %v224 = vpop.permute.xlu0 %223
        %v225 = vlaneseq
        %v226 = vshrl.u32 %v225, 7
        %v227 = vsub.s32 5, %v226
        %v228 = vrot.slane %v168, %v227
        %230 = vbcast.lane.b32.xlu0 %v228, 256
        %v231 = vpop.permute.xlu0 %230
        %s233 = sor.u32 256, 8
        %234 = vbcast.lane.b32.xlu0 %v228, %s233
        %v235 = vpop.permute.xlu0 %234
        %v236 = vlaneseq
        %v237 = vshrl.u32 %v236, 7
        %v238 = vsub.s32 6, %v237
        %v239 = vrot.slane %v168, %v238
        %241 = vbcast.lane.b32.xlu0 %v239, 256
        %v242 = vpop.permute.xlu0 %241
        %s244 = sor.u32 256, 8
        %245 = vbcast.lane.b32.xlu0 %v239, %s244
        %v246 = vpop.permute.xlu0 %245
        %v247 = vlaneseq
        %v248 = vshrl.u32 %v247, 7
        %v249 = vsub.s32 7, %v248
        %v250 = vrot.slane %v168, %v249
        %252 = vbcast.lane.b32.xlu0 %v250, 256
        %v253 = vpop.permute.xlu0 %252
        %s255 = sor.u32 256, 8
        %256 = vbcast.lane.b32.xlu0 %v250, %s255
        %v257 = vpop.permute.xlu0 %256
        %v258 = vlaneseq
        %v259 = vshrl.u32 %v258, 7
        %v260 = vsub.s32 0, %v259
        %v261 = vrot.slane %v169, %v260
        %263 = vbcast.lane.b32.xlu0 %v261, 256
        %v264 = vpop.permute.xlu0 %263
        %s266 = sor.u32 256, 8
        %267 = vbcast.lane.b32.xlu0 %v261, %s266
        %v268 = vpop.permute.xlu0 %267
        %v269 = vlaneseq
        %v270 = vshrl.u32 %v269, 7
        %v271 = vsub.s32 1, %v270
        %v272 = vrot.slane %v169, %v271
        %274 = vbcast.lane.b32.xlu0 %v272, 256
        %v275 = vpop.permute.xlu0 %274
        %s277 = sor.u32 256, 8
        %278 = vbcast.lane.b32.xlu0 %v272, %s277
        %v279 = vpop.permute.xlu0 %278
        %v280 = vlaneseq
        %v281 = vshrl.u32 %v280, 7
        %v282 = vsub.s32 2, %v281
        %v283 = vrot.slane %v169, %v282
        %285 = vbcast.lane.b32.xlu0 %v283, 256
        %v286 = vpop.permute.xlu0 %285
        %s288 = sor.u32 256, 8
        %289 = vbcast.lane.b32.xlu0 %v283, %s288
        %v290 = vpop.permute.xlu0 %289
        %v291 = vlaneseq
        %v292 = vshrl.u32 %v291, 7
        %v293 = vsub.s32 3, %v292
        %v294 = vrot.slane %v169, %v293
        %296 = vbcast.lane.b32.xlu0 %v294, 256
        %v297 = vpop.permute.xlu0 %296
        %s299 = sor.u32 256, 8
        %300 = vbcast.lane.b32.xlu0 %v294, %s299
        %v301 = vpop.permute.xlu0 %300
        %v302 = vlaneseq
        %v303 = vshrl.u32 %v302, 7
        %v304 = vsub.s32 4, %v303
        %v305 = vrot.slane %v169, %v304
        %307 = vbcast.lane.b32.xlu0 %v305, 256
        %v308 = vpop.permute.xlu0 %307
        %s310 = sor.u32 256, 8
        %311 = vbcast.lane.b32.xlu0 %v305, %s310
        %v312 = vpop.permute.xlu0 %311
        %v313 = vlaneseq
        %v314 = vshrl.u32 %v313, 7
        %v315 = vsub.s32 5, %v314
        %v316 = vrot.slane %v169, %v315
        %318 = vbcast.lane.b32.xlu0 %v316, 256
        %v319 = vpop.permute.xlu0 %318
        %s321 = sor.u32 256, 8
        %322 = vbcast.lane.b32.xlu0 %v316, %s321
        %v323 = vpop.permute.xlu0 %322
        %v324 = vlaneseq
        %v325 = vshrl.u32 %v324, 7
        %v326 = vsub.s32 6, %v325
        %v327 = vrot.slane %v169, %v326
        %329 = vbcast.lane.b32.xlu0 %v327, 256
        %v330 = vpop.permute.xlu0 %329
        %s332 = sor.u32 256, 8
        %333 = vbcast.lane.b32.xlu0 %v327, %s332
        %v334 = vpop.permute.xlu0 %333
        %v335 = vlaneseq
        %v336 = vshrl.u32 %v335, 7
        %v337 = vsub.s32 7, %v336
        %v338 = vrot.slane %v169, %v337
        %340 = vbcast.lane.b32.xlu0 %v338, 256
        %v341 = vpop.permute.xlu0 %340
        %s343 = sor.u32 256, 8
        %344 = vbcast.lane.b32.xlu0 %v338, %s343
        %v345 = vpop.permute.xlu0 %344
        %v346 = vcombine.high %v176, 0.0
        %v348 = vunpack.c.l.s4 1983009808
        %v349 = vunpack.c.0.s8 %v348
        %v350 = vlaneseq
        %v351 = vshrl.u32 %v350, 7
        %v352 = vsub.s32 %v349, %v351
        %v353 = vrot.slane %v176, %v352
        %v355 = vunpack.c.l.s4 1983009808
        %v356 = vunpack.c.0.s8 %v355
        %v357 = vlaneseq
        %v358 = vshrl.u32 %v357, 7
        %v359 = vsub.s32 %v356, %v358
        %v360 = vrot.slane %v346, %v359
        %v361 = vcombine.high %v353, 0.0
        %v363 = vunpack.c.l.s4 1934713408
        %v364 = vunpack.c.0.s8 %v363
        %v365 = vlaneseq
        %v366 = vshrl.u32 %v365, 7
        %v367 = vsub.s32 %v364, %v366
        %v368 = vrot.slane %v353, %v367
        %v370 = vunpack.c.l.s4 1934713408
        %v371 = vunpack.c.0.s8 %v370
        %v372 = vlaneseq
        %v373 = vshrl.u32 %v372, 7
        %v374 = vsub.s32 %v371, %v373
        %v375 = vrot.slane %v361, %v374
        %v376 = vcombine.high %v360, 0.0
        %v378 = vunpack.c.l.s4 1934713408
        %v379 = vunpack.c.0.s8 %v378
        %v380 = vlaneseq
        %v381 = vshrl.u32 %v380, 7
        %v382 = vsub.s32 %v379, %v381
        %v383 = vrot.slane %v360, %v382
        %v385 = vunpack.c.l.s4 1934713408
        %v386 = vunpack.c.0.s8 %v385
        %v387 = vlaneseq
        %v388 = vshrl.u32 %v387, 7
        %v389 = vsub.s32 %v386, %v388
        %v390 = vrot.slane %v376, %v389
        %v391 = vcombine.high %v368, 0.0
        %v392 = vcombine.high %v375, 0.0
        %v393 = vcombine.high %v383, 0.0
        %v394 = vcombine.high %v390, 0.0
        %v395 = vcombine.high %v180, 0.0
        %v397 = vunpack.c.l.s4 1983009808
        %v398 = vunpack.c.0.s8 %v397
        %v399 = vlaneseq
        %v400 = vshrl.u32 %v399, 7
        %v401 = vsub.s32 %v398, %v400
        %v402 = vrot.slane %v180, %v401
        %v404 = vunpack.c.l.s4 1983009808
        %v405 = vunpack.c.0.s8 %v404
        %v406 = vlaneseq
        %v407 = vshrl.u32 %v406, 7
        %v408 = vsub.s32 %v405, %v407
        %v409 = vrot.slane %v395, %v408
        %v410 = vcombine.high %v402, 0.0
        %v412 = vunpack.c.l.s4 1934713408
        %v413 = vunpack.c.0.s8 %v412
        %v414 = vlaneseq
        %v415 = vshrl.u32 %v414, 7
        %v416 = vsub.s32 %v413, %v415
        %v417 = vrot.slane %v402, %v416
        %v419 = vunpack.c.l.s4 1934713408
        %v420 = vunpack.c.0.s8 %v419
        %v421 = vlaneseq
        %v422 = vshrl.u32 %v421, 7
        %v423 = vsub.s32 %v420, %v422
        %v424 = vrot.slane %v410, %v423
        %v425 = vcombine.high %v409, 0.0
        %v427 = vunpack.c.l.s4 1934713408
        %v428 = vunpack.c.0.s8 %v427
        %v429 = vlaneseq
        %v430 = vshrl.u32 %v429, 7
        %v431 = vsub.s32 %v428, %v430
        %v432 = vrot.slane %v409, %v431
        %v434 = vunpack.c.l.s4 1934713408
        %v435 = vunpack.c.0.s8 %v434
        %v436 = vlaneseq
        %v437 = vshrl.u32 %v436, 7
        %v438 = vsub.s32 %v435, %v437
        %v439 = vrot.slane %v425, %v438
        %v440 = vcombine.high %v417, 0.0
        %v441 = vcombine.high %v424, 0.0
        %v442 = vcombine.high %v432, 0.0
        %v443 = vcombine.high %v439, 0.0
        %v444 = vcombine.high %v187, 0.0
        %v446 = vunpack.c.l.s4 1983009808
        %v447 = vunpack.c.0.s8 %v446
        %v448 = vlaneseq
        %v449 = vshrl.u32 %v448, 7
        %v450 = vsub.s32 %v447, %v449
        %v451 = vrot.slane %v187, %v450
        %v453 = vunpack.c.l.s4 1983009808
        %v454 = vunpack.c.0.s8 %v453
        %v455 = vlaneseq
        %v456 = vshrl.u32 %v455, 7
        %v457 = vsub.s32 %v454, %v456
        %v458 = vrot.slane %v444, %v457
        %v459 = vcombine.high %v451, 0.0
        %v461 = vunpack.c.l.s4 1934713408
        %v462 = vunpack.c.0.s8 %v461
        %v463 = vlaneseq
        %v464 = vshrl.u32 %v463, 7
        %v465 = vsub.s32 %v462, %v464
        %v466 = vrot.slane %v451, %v465
        %v468 = vunpack.c.l.s4 1934713408
        %v469 = vunpack.c.0.s8 %v468
        %v470 = vlaneseq
        %v471 = vshrl.u32 %v470, 7
        %v472 = vsub.s32 %v469, %v471
        %v473 = vrot.slane %v459, %v472
        %v474 = vcombine.high %v458, 0.0
        %v476 = vunpack.c.l.s4 1934713408
        %v477 = vunpack.c.0.s8 %v476
        %v478 = vlaneseq
        %v479 = vshrl.u32 %v478, 7
        %v480 = vsub.s32 %v477, %v479
        %v481 = vrot.slane %v458, %v480
        %v483 = vunpack.c.l.s4 1934713408
        %v484 = vunpack.c.0.s8 %v483
        %v485 = vlaneseq
        %v486 = vshrl.u32 %v485, 7
        %v487 = vsub.s32 %v484, %v486
        %v488 = vrot.slane %v474, %v487
        %v489 = vcombine.high %v466, 0.0
        %v490 = vcombine.high %v473, 0.0
        %v491 = vcombine.high %v481, 0.0
        %v492 = vcombine.high %v488, 0.0
        %v493 = vcombine.high %v191, 0.0
        %v495 = vunpack.c.l.s4 1983009808
        %v496 = vunpack.c.0.s8 %v495
        %v497 = vlaneseq
        %v498 = vshrl.u32 %v497, 7
        %v499 = vsub.s32 %v496, %v498
        %v500 = vrot.slane %v191, %v499
        %v502 = vunpack.c.l.s4 1983009808
        %v503 = vunpack.c.0.s8 %v502
        %v504 = vlaneseq
        %v505 = vshrl.u32 %v504, 7
        %v506 = vsub.s32 %v503, %v505
        %v507 = vrot.slane %v493, %v506
        %v508 = vcombine.high %v500, 0.0
        %v510 = vunpack.c.l.s4 1934713408
        %v511 = vunpack.c.0.s8 %v510
        %v512 = vlaneseq
        %v513 = vshrl.u32 %v512, 7
        %v514 = vsub.s32 %v511, %v513
        %v515 = vrot.slane %v500, %v514
        %v517 = vunpack.c.l.s4 1934713408
        %v518 = vunpack.c.0.s8 %v517
        %v519 = vlaneseq
        %v520 = vshrl.u32 %v519, 7
        %v521 = vsub.s32 %v518, %v520
        %v522 = vrot.slane %v508, %v521
        %v523 = vcombine.high %v507, 0.0
        %v525 = vunpack.c.l.s4 1934713408
        %v526 = vunpack.c.0.s8 %v525
        %v527 = vlaneseq
        %v528 = vshrl.u32 %v527, 7
        %v529 = vsub.s32 %v526, %v528
        %v530 = vrot.slane %v507, %v529
        %v532 = vunpack.c.l.s4 1934713408
        %v533 = vunpack.c.0.s8 %v532
        %v534 = vlaneseq
        %v535 = vshrl.u32 %v534, 7
        %v536 = vsub.s32 %v533, %v535
        %v537 = vrot.slane %v523, %v536
        %v538 = vcombine.high %v515, 0.0
        %v539 = vcombine.high %v522, 0.0
        %v540 = vcombine.high %v530, 0.0
        %v541 = vcombine.high %v537, 0.0
        %v542 = vcombine.high %v198, 0.0
        %v544 = vunpack.c.l.s4 1983009808
        %v545 = vunpack.c.0.s8 %v544
        %v546 = vlaneseq
        %v547 = vshrl.u32 %v546, 7
        %v548 = vsub.s32 %v545, %v547
        %v549 = vrot.slane %v198, %v548
        %v551 = vunpack.c.l.s4 1983009808
        %v552 = vunpack.c.0.s8 %v551
        %v553 = vlaneseq
        %v554 = vshrl.u32 %v553, 7
        %v555 = vsub.s32 %v552, %v554
        %v556 = vrot.slane %v542, %v555
        %v557 = vcombine.high %v549, 0.0
        %v559 = vunpack.c.l.s4 1934713408
        %v560 = vunpack.c.0.s8 %v559
        %v561 = vlaneseq
        %v562 = vshrl.u32 %v561, 7
        %v563 = vsub.s32 %v560, %v562
        %v564 = vrot.slane %v549, %v563
        %v566 = vunpack.c.l.s4 1934713408
        %v567 = vunpack.c.0.s8 %v566
        %v568 = vlaneseq
        %v569 = vshrl.u32 %v568, 7
        %v570 = vsub.s32 %v567, %v569
        %v571 = vrot.slane %v557, %v570
        %v572 = vcombine.high %v556, 0.0
        %v574 = vunpack.c.l.s4 1934713408
        %v575 = vunpack.c.0.s8 %v574
        %v576 = vlaneseq
        %v577 = vshrl.u32 %v576, 7
        %v578 = vsub.s32 %v575, %v577
        %v579 = vrot.slane %v556, %v578
        %v581 = vunpack.c.l.s4 1934713408
        %v582 = vunpack.c.0.s8 %v581
        %v583 = vlaneseq
        %v584 = vshrl.u32 %v583, 7
        %v585 = vsub.s32 %v582, %v584
        %v586 = vrot.slane %v572, %v585
        %v587 = vcombine.high %v564, 0.0
        %v588 = vcombine.high %v571, 0.0
        %v589 = vcombine.high %v579, 0.0
        %v590 = vcombine.high %v586, 0.0
        %v591 = vcombine.high %v202, 0.0
        %v593 = vunpack.c.l.s4 1983009808
        %v594 = vunpack.c.0.s8 %v593
        %v595 = vlaneseq
        %v596 = vshrl.u32 %v595, 7
        %v597 = vsub.s32 %v594, %v596
        %v598 = vrot.slane %v202, %v597
        %v600 = vunpack.c.l.s4 1983009808
        %v601 = vunpack.c.0.s8 %v600
        %v602 = vlaneseq
        %v603 = vshrl.u32 %v602, 7
        %v604 = vsub.s32 %v601, %v603
        %v605 = vrot.slane %v591, %v604
        %v606 = vcombine.high %v598, 0.0
        %v608 = vunpack.c.l.s4 1934713408
        %v609 = vunpack.c.0.s8 %v608
        %v610 = vlaneseq
        %v611 = vshrl.u32 %v610, 7
        %v612 = vsub.s32 %v609, %v611
        %v613 = vrot.slane %v598, %v612
        %v615 = vunpack.c.l.s4 1934713408
        %v616 = vunpack.c.0.s8 %v615
        %v617 = vlaneseq
        %v618 = vshrl.u32 %v617, 7
        %v619 = vsub.s32 %v616, %v618
        %v620 = vrot.slane %v606, %v619
        %v621 = vcombine.high %v605, 0.0
        %v623 = vunpack.c.l.s4 1934713408
        %v624 = vunpack.c.0.s8 %v623
        %v625 = vlaneseq
        %v626 = vshrl.u32 %v625, 7
        %v627 = vsub.s32 %v624, %v626
        %v628 = vrot.slane %v605, %v627
        %v630 = vunpack.c.l.s4 1934713408
        %v631 = vunpack.c.0.s8 %v630
        %v632 = vlaneseq
        %v633 = vshrl.u32 %v632, 7
        %v634 = vsub.s32 %v631, %v633
        %v635 = vrot.slane %v621, %v634
        %v636 = vcombine.high %v613, 0.0
        %v637 = vcombine.high %v620, 0.0
        %v638 = vcombine.high %v628, 0.0
        %v639 = vcombine.high %v635, 0.0
        %v640 = vcombine.high %v209, 0.0
        %v642 = vunpack.c.l.s4 1983009808
        %v643 = vunpack.c.0.s8 %v642
        %v644 = vlaneseq
        %v645 = vshrl.u32 %v644, 7
        %v646 = vsub.s32 %v643, %v645
        %v647 = vrot.slane %v209, %v646
        %v649 = vunpack.c.l.s4 1983009808
        %v650 = vunpack.c.0.s8 %v649
        %v651 = vlaneseq
        %v652 = vshrl.u32 %v651, 7
        %v653 = vsub.s32 %v650, %v652
        %v654 = vrot.slane %v640, %v653
        %v655 = vcombine.high %v647, 0.0
        %v657 = vunpack.c.l.s4 1934713408
        %v658 = vunpack.c.0.s8 %v657
        %v659 = vlaneseq
        %v660 = vshrl.u32 %v659, 7
        %v661 = vsub.s32 %v658, %v660
        %v662 = vrot.slane %v647, %v661
        %v664 = vunpack.c.l.s4 1934713408
        %v665 = vunpack.c.0.s8 %v664
        %v666 = vlaneseq
        %v667 = vshrl.u32 %v666, 7
        %v668 = vsub.s32 %v665, %v667
        %v669 = vrot.slane %v655, %v668
        %v670 = vcombine.high %v654, 0.0
        %v672 = vunpack.c.l.s4 1934713408
        %v673 = vunpack.c.0.s8 %v672
        %v674 = vlaneseq
        %v675 = vshrl.u32 %v674, 7
        %v676 = vsub.s32 %v673, %v675
        %v677 = vrot.slane %v654, %v676
        %v679 = vunpack.c.l.s4 1934713408
        %v680 = vunpack.c.0.s8 %v679
        %v681 = vlaneseq
        %v682 = vshrl.u32 %v681, 7
        %v683 = vsub.s32 %v680, %v682
        %v684 = vrot.slane %v670, %v683
        %v685 = vcombine.high %v662, 0.0
        %v686 = vcombine.high %v669, 0.0
        %v687 = vcombine.high %v677, 0.0
        %v688 = vcombine.high %v684, 0.0
        %v689 = vcombine.high %v213, 0.0
        %v691 = vunpack.c.l.s4 1983009808
        %v692 = vunpack.c.0.s8 %v691
        %v693 = vlaneseq
        %v694 = vshrl.u32 %v693, 7
        %v695 = vsub.s32 %v692, %v694
        %v696 = vrot.slane %v213, %v695
        %v698 = vunpack.c.l.s4 1983009808
        %v699 = vunpack.c.0.s8 %v698
        %v700 = vlaneseq
        %v701 = vshrl.u32 %v700, 7
        %v702 = vsub.s32 %v699, %v701
        %v703 = vrot.slane %v689, %v702
        %v704 = vcombine.high %v696, 0.0
        %v706 = vunpack.c.l.s4 1934713408
        %v707 = vunpack.c.0.s8 %v706
        %v708 = vlaneseq
        %v709 = vshrl.u32 %v708, 7
        %v710 = vsub.s32 %v707, %v709
        %v711 = vrot.slane %v696, %v710
        %v713 = vunpack.c.l.s4 1934713408
        %v714 = vunpack.c.0.s8 %v713
        %v715 = vlaneseq
        %v716 = vshrl.u32 %v715, 7
        %v717 = vsub.s32 %v714, %v716
        %v718 = vrot.slane %v704, %v717
        %v719 = vcombine.high %v703, 0.0
        %v721 = vunpack.c.l.s4 1934713408
        %v722 = vunpack.c.0.s8 %v721
        %v723 = vlaneseq
        %v724 = vshrl.u32 %v723, 7
        %v725 = vsub.s32 %v722, %v724
        %v726 = vrot.slane %v703, %v725
        %v728 = vunpack.c.l.s4 1934713408
        %v729 = vunpack.c.0.s8 %v728
        %v730 = vlaneseq
        %v731 = vshrl.u32 %v730, 7
        %v732 = vsub.s32 %v729, %v731
        %v733 = vrot.slane %v719, %v732
        %v734 = vcombine.high %v711, 0.0
        %v735 = vcombine.high %v718, 0.0
        %v736 = vcombine.high %v726, 0.0
        %v737 = vcombine.high %v733, 0.0
        %v738 = vcombine.high %v220, 0.0
        %v740 = vunpack.c.l.s4 1983009808
        %v741 = vunpack.c.0.s8 %v740
        %v742 = vlaneseq
        %v743 = vshrl.u32 %v742, 7
        %v744 = vsub.s32 %v741, %v743
        %v745 = vrot.slane %v220, %v744
        %v747 = vunpack.c.l.s4 1983009808
        %v748 = vunpack.c.0.s8 %v747
        %v749 = vlaneseq
        %v750 = vshrl.u32 %v749, 7
        %v751 = vsub.s32 %v748, %v750
        %v752 = vrot.slane %v738, %v751
        %v753 = vcombine.high %v745, 0.0
        %v755 = vunpack.c.l.s4 1934713408
        %v756 = vunpack.c.0.s8 %v755
        %v757 = vlaneseq
        %v758 = vshrl.u32 %v757, 7
        %v759 = vsub.s32 %v756, %v758
        %v760 = vrot.slane %v745, %v759
        %v762 = vunpack.c.l.s4 1934713408
        %v763 = vunpack.c.0.s8 %v762
        %v764 = vlaneseq
        %v765 = vshrl.u32 %v764, 7
        %v766 = vsub.s32 %v763, %v765
        %v767 = vrot.slane %v753, %v766
        %v768 = vcombine.high %v752, 0.0
        %v770 = vunpack.c.l.s4 1934713408
        %v771 = vunpack.c.0.s8 %v770
        %v772 = vlaneseq
        %v773 = vshrl.u32 %v772, 7
        %v774 = vsub.s32 %v771, %v773
        %v775 = vrot.slane %v752, %v774
        %v777 = vunpack.c.l.s4 1934713408
        %v778 = vunpack.c.0.s8 %v777
        %v779 = vlaneseq
        %v780 = vshrl.u32 %v779, 7
        %v781 = vsub.s32 %v778, %v780
        %v782 = vrot.slane %v768, %v781
        %v783 = vcombine.high %v760, 0.0
        %v784 = vcombine.high %v767, 0.0
        %v785 = vcombine.high %v775, 0.0
        %v786 = vcombine.high %v782, 0.0
        %v787 = vcombine.high %v224, 0.0
        %v789 = vunpack.c.l.s4 1983009808
        %v790 = vunpack.c.0.s8 %v789
        %v791 = vlaneseq
        %v792 = vshrl.u32 %v791, 7
        %v793 = vsub.s32 %v790, %v792
        %v794 = vrot.slane %v224, %v793
        %v796 = vunpack.c.l.s4 1983009808
        %v797 = vunpack.c.0.s8 %v796
        %v798 = vlaneseq
        %v799 = vshrl.u32 %v798, 7
        %v800 = vsub.s32 %v797, %v799
        %v801 = vrot.slane %v787, %v800
        %v802 = vcombine.high %v794, 0.0
        %v804 = vunpack.c.l.s4 1934713408
        %v805 = vunpack.c.0.s8 %v804
        %v806 = vlaneseq
        %v807 = vshrl.u32 %v806, 7
        %v808 = vsub.s32 %v805, %v807
        %v809 = vrot.slane %v794, %v808
        %v811 = vunpack.c.l.s4 1934713408
        %v812 = vunpack.c.0.s8 %v811
        %v813 = vlaneseq
        %v814 = vshrl.u32 %v813, 7
        %v815 = vsub.s32 %v812, %v814
        %v816 = vrot.slane %v802, %v815
        %v817 = vcombine.high %v801, 0.0
        %v819 = vunpack.c.l.s4 1934713408
        %v820 = vunpack.c.0.s8 %v819
        %v821 = vlaneseq
        %v822 = vshrl.u32 %v821, 7
        %v823 = vsub.s32 %v820, %v822
        %v824 = vrot.slane %v801, %v823
        %v826 = vunpack.c.l.s4 1934713408
        %v827 = vunpack.c.0.s8 %v826
        %v828 = vlaneseq
        %v829 = vshrl.u32 %v828, 7
        %v830 = vsub.s32 %v827, %v829
        %v831 = vrot.slane %v817, %v830
        %v832 = vcombine.high %v809, 0.0
        %v833 = vcombine.high %v816, 0.0
        %v834 = vcombine.high %v824, 0.0
        %v835 = vcombine.high %v831, 0.0
        %v836 = vcombine.high %v231, 0.0
        %v838 = vunpack.c.l.s4 1983009808
        %v839 = vunpack.c.0.s8 %v838
        %v840 = vlaneseq
        %v841 = vshrl.u32 %v840, 7
        %v842 = vsub.s32 %v839, %v841
        %v843 = vrot.slane %v231, %v842
        %v845 = vunpack.c.l.s4 1983009808
        %v846 = vunpack.c.0.s8 %v845
        %v847 = vlaneseq
        %v848 = vshrl.u32 %v847, 7
        %v849 = vsub.s32 %v846, %v848
        %v850 = vrot.slane %v836, %v849
        %v851 = vcombine.high %v843, 0.0
        %v853 = vunpack.c.l.s4 1934713408
        %v854 = vunpack.c.0.s8 %v853
        %v855 = vlaneseq
        %v856 = vshrl.u32 %v855, 7
        %v857 = vsub.s32 %v854, %v856
        %v858 = vrot.slane %v843, %v857
        %v860 = vunpack.c.l.s4 1934713408
        %v861 = vunpack.c.0.s8 %v860
        %v862 = vlaneseq
        %v863 = vshrl.u32 %v862, 7
        %v864 = vsub.s32 %v861, %v863
        %v865 = vrot.slane %v851, %v864
        %v866 = vcombine.high %v850, 0.0
        %v868 = vunpack.c.l.s4 1934713408
        %v869 = vunpack.c.0.s8 %v868
        %v870 = vlaneseq
        %v871 = vshrl.u32 %v870, 7
        %v872 = vsub.s32 %v869, %v871
        %v873 = vrot.slane %v850, %v872
        %v875 = vunpack.c.l.s4 1934713408
        %v876 = vunpack.c.0.s8 %v875
        %v877 = vlaneseq
        %v878 = vshrl.u32 %v877, 7
        %v879 = vsub.s32 %v876, %v878
        %v880 = vrot.slane %v866, %v879
        %v881 = vcombine.high %v858, 0.0
        %v882 = vcombine.high %v865, 0.0
        %v883 = vcombine.high %v873, 0.0
        %v884 = vcombine.high %v880, 0.0
        %v885 = vcombine.high %v235, 0.0
        %v887 = vunpack.c.l.s4 1983009808
        %v888 = vunpack.c.0.s8 %v887
        %v889 = vlaneseq
        %v890 = vshrl.u32 %v889, 7
        %v891 = vsub.s32 %v888, %v890
        %v892 = vrot.slane %v235, %v891
        %v894 = vunpack.c.l.s4 1983009808
        %v895 = vunpack.c.0.s8 %v894
        %v896 = vlaneseq
        %v897 = vshrl.u32 %v896, 7
        %v898 = vsub.s32 %v895, %v897
        %v899 = vrot.slane %v885, %v898
        %v900 = vcombine.high %v892, 0.0
        %v902 = vunpack.c.l.s4 1934713408
        %v903 = vunpack.c.0.s8 %v902
        %v904 = vlaneseq
        %v905 = vshrl.u32 %v904, 7
        %v906 = vsub.s32 %v903, %v905
        %v907 = vrot.slane %v892, %v906
        %v909 = vunpack.c.l.s4 1934713408
        %v910 = vunpack.c.0.s8 %v909
        %v911 = vlaneseq
        %v912 = vshrl.u32 %v911, 7
        %v913 = vsub.s32 %v910, %v912
        %v914 = vrot.slane %v900, %v913
        %v915 = vcombine.high %v899, 0.0
        %v917 = vunpack.c.l.s4 1934713408
        %v918 = vunpack.c.0.s8 %v917
        %v919 = vlaneseq
        %v920 = vshrl.u32 %v919, 7
        %v921 = vsub.s32 %v918, %v920
        %v922 = vrot.slane %v899, %v921
        %v924 = vunpack.c.l.s4 1934713408
        %v925 = vunpack.c.0.s8 %v924
        %v926 = vlaneseq
        %v927 = vshrl.u32 %v926, 7
        %v928 = vsub.s32 %v925, %v927
        %v929 = vrot.slane %v915, %v928
        %v930 = vcombine.high %v907, 0.0
        %v931 = vcombine.high %v914, 0.0
        %v932 = vcombine.high %v922, 0.0
        %v933 = vcombine.high %v929, 0.0
        %v934 = vcombine.high %v242, 0.0
        %v936 = vunpack.c.l.s4 1983009808
        %v937 = vunpack.c.0.s8 %v936
        %v938 = vlaneseq
        %v939 = vshrl.u32 %v938, 7
        %v940 = vsub.s32 %v937, %v939
        %v941 = vrot.slane %v242, %v940
        %v943 = vunpack.c.l.s4 1983009808
        %v944 = vunpack.c.0.s8 %v943
        %v945 = vlaneseq
        %v946 = vshrl.u32 %v945, 7
        %v947 = vsub.s32 %v944, %v946
        %v948 = vrot.slane %v934, %v947
        %v949 = vcombine.high %v941, 0.0
        %v951 = vunpack.c.l.s4 1934713408
        %v952 = vunpack.c.0.s8 %v951
        %v953 = vlaneseq
        %v954 = vshrl.u32 %v953, 7
        %v955 = vsub.s32 %v952, %v954
        %v956 = vrot.slane %v941, %v955
        %v958 = vunpack.c.l.s4 1934713408
        %v959 = vunpack.c.0.s8 %v958
        %v960 = vlaneseq
        %v961 = vshrl.u32 %v960, 7
        %v962 = vsub.s32 %v959, %v961
        %v963 = vrot.slane %v949, %v962
        %v964 = vcombine.high %v948, 0.0
        %v966 = vunpack.c.l.s4 1934713408
        %v967 = vunpack.c.0.s8 %v966
        %v968 = vlaneseq
        %v969 = vshrl.u32 %v968, 7
        %v970 = vsub.s32 %v967, %v969
        %v971 = vrot.slane %v948, %v970
        %v973 = vunpack.c.l.s4 1934713408
        %v974 = vunpack.c.0.s8 %v973
        %v975 = vlaneseq
        %v976 = vshrl.u32 %v975, 7
        %v977 = vsub.s32 %v974, %v976
        %v978 = vrot.slane %v964, %v977
        %v979 = vcombine.high %v956, 0.0
        %v980 = vcombine.high %v963, 0.0
        %v981 = vcombine.high %v971, 0.0
        %v982 = vcombine.high %v978, 0.0
        %v983 = vcombine.high %v246, 0.0
        %v985 = vunpack.c.l.s4 1983009808
        %v986 = vunpack.c.0.s8 %v985
        %v987 = vlaneseq
        %v988 = vshrl.u32 %v987, 7
        %v989 = vsub.s32 %v986, %v988
        %v990 = vrot.slane %v246, %v989
        %v992 = vunpack.c.l.s4 1983009808
        %v993 = vunpack.c.0.s8 %v992
        %v994 = vlaneseq
        %v995 = vshrl.u32 %v994, 7
        %v996 = vsub.s32 %v993, %v995
        %v997 = vrot.slane %v983, %v996
        %v998 = vcombine.high %v990, 0.0
        %v1000 = vunpack.c.l.s4 1934713408
        %v1001 = vunpack.c.0.s8 %v1000
        %v1002 = vlaneseq
        %v1003 = vshrl.u32 %v1002, 7
        %v1004 = vsub.s32 %v1001, %v1003
        %v1005 = vrot.slane %v990, %v1004
        %v1007 = vunpack.c.l.s4 1934713408
        %v1008 = vunpack.c.0.s8 %v1007
        %v1009 = vlaneseq
        %v1010 = vshrl.u32 %v1009, 7
        %v1011 = vsub.s32 %v1008, %v1010
        %v1012 = vrot.slane %v998, %v1011
        %v1013 = vcombine.high %v997, 0.0
        %v1015 = vunpack.c.l.s4 1934713408
        %v1016 = vunpack.c.0.s8 %v1015
        %v1017 = vlaneseq
        %v1018 = vshrl.u32 %v1017, 7
        %v1019 = vsub.s32 %v1016, %v1018
        %v1020 = vrot.slane %v997, %v1019
        %v1022 = vunpack.c.l.s4 1934713408
        %v1023 = vunpack.c.0.s8 %v1022
        %v1024 = vlaneseq
        %v1025 = vshrl.u32 %v1024, 7
        %v1026 = vsub.s32 %v1023, %v1025
        %v1027 = vrot.slane %v1013, %v1026
        %v1028 = vcombine.high %v1005, 0.0
        %v1029 = vcombine.high %v1012, 0.0
        %v1030 = vcombine.high %v1020, 0.0
        %v1031 = vcombine.high %v1027, 0.0
        %v1032 = vcombine.high %v253, 0.0
        %v1034 = vunpack.c.l.s4 1983009808
        %v1035 = vunpack.c.0.s8 %v1034
        %v1036 = vlaneseq
        %v1037 = vshrl.u32 %v1036, 7
        %v1038 = vsub.s32 %v1035, %v1037
        %v1039 = vrot.slane %v253, %v1038
        %v1041 = vunpack.c.l.s4 1983009808
        %v1042 = vunpack.c.0.s8 %v1041
        %v1043 = vlaneseq
        %v1044 = vshrl.u32 %v1043, 7
        %v1045 = vsub.s32 %v1042, %v1044
        %v1046 = vrot.slane %v1032, %v1045
        %v1047 = vcombine.high %v1039, 0.0
        %v1049 = vunpack.c.l.s4 1934713408
        %v1050 = vunpack.c.0.s8 %v1049
        %v1051 = vlaneseq
        %v1052 = vshrl.u32 %v1051, 7
        %v1053 = vsub.s32 %v1050, %v1052
        %v1054 = vrot.slane %v1039, %v1053
        %v1056 = vunpack.c.l.s4 1934713408
        %v1057 = vunpack.c.0.s8 %v1056
        %v1058 = vlaneseq
        %v1059 = vshrl.u32 %v1058, 7
        %v1060 = vsub.s32 %v1057, %v1059
        %v1061 = vrot.slane %v1047, %v1060
        %v1062 = vcombine.high %v1046, 0.0
        %v1064 = vunpack.c.l.s4 1934713408
        %v1065 = vunpack.c.0.s8 %v1064
        %v1066 = vlaneseq
        %v1067 = vshrl.u32 %v1066, 7
        %v1068 = vsub.s32 %v1065, %v1067
        %v1069 = vrot.slane %v1046, %v1068
        %v1071 = vunpack.c.l.s4 1934713408
        %v1072 = vunpack.c.0.s8 %v1071
        %v1073 = vlaneseq
        %v1074 = vshrl.u32 %v1073, 7
        %v1075 = vsub.s32 %v1072, %v1074
        %v1076 = vrot.slane %v1062, %v1075
        %v1077 = vcombine.high %v1054, 0.0
        %v1078 = vcombine.high %v1061, 0.0
        %v1079 = vcombine.high %v1069, 0.0
        %v1080 = vcombine.high %v1076, 0.0
        %v1081 = vcombine.high %v257, 0.0
        %v1083 = vunpack.c.l.s4 1983009808
        %v1084 = vunpack.c.0.s8 %v1083
        %v1085 = vlaneseq
        %v1086 = vshrl.u32 %v1085, 7
        %v1087 = vsub.s32 %v1084, %v1086
        %v1088 = vrot.slane %v257, %v1087
        %v1090 = vunpack.c.l.s4 1983009808
        %v1091 = vunpack.c.0.s8 %v1090
        %v1092 = vlaneseq
        %v1093 = vshrl.u32 %v1092, 7
        %v1094 = vsub.s32 %v1091, %v1093
        %v1095 = vrot.slane %v1081, %v1094
        %v1096 = vcombine.high %v1088, 0.0
        %v1098 = vunpack.c.l.s4 1934713408
        %v1099 = vunpack.c.0.s8 %v1098
        %v1100 = vlaneseq
        %v1101 = vshrl.u32 %v1100, 7
        %v1102 = vsub.s32 %v1099, %v1101
        %v1103 = vrot.slane %v1088, %v1102
        %v1105 = vunpack.c.l.s4 1934713408
        %v1106 = vunpack.c.0.s8 %v1105
        %v1107 = vlaneseq
        %v1108 = vshrl.u32 %v1107, 7
        %v1109 = vsub.s32 %v1106, %v1108
        %v1110 = vrot.slane %v1096, %v1109
        %v1111 = vcombine.high %v1095, 0.0
        %v1113 = vunpack.c.l.s4 1934713408
        %v1114 = vunpack.c.0.s8 %v1113
        %v1115 = vlaneseq
        %v1116 = vshrl.u32 %v1115, 7
        %v1117 = vsub.s32 %v1114, %v1116
        %v1118 = vrot.slane %v1095, %v1117
        %v1120 = vunpack.c.l.s4 1934713408
        %v1121 = vunpack.c.0.s8 %v1120
        %v1122 = vlaneseq
        %v1123 = vshrl.u32 %v1122, 7
        %v1124 = vsub.s32 %v1121, %v1123
        %v1125 = vrot.slane %v1111, %v1124
        %v1126 = vcombine.high %v1103, 0.0
        %v1127 = vcombine.high %v1110, 0.0
        %v1128 = vcombine.high %v1118, 0.0
        %v1129 = vcombine.high %v1125, 0.0
        %v1130 = vcombine.high %v264, 0.0
        %v1132 = vunpack.c.l.s4 1983009808
        %v1133 = vunpack.c.0.s8 %v1132
        %v1134 = vlaneseq
        %v1135 = vshrl.u32 %v1134, 7
        %v1136 = vsub.s32 %v1133, %v1135
        %v1137 = vrot.slane %v264, %v1136
        %v1139 = vunpack.c.l.s4 1983009808
        %v1140 = vunpack.c.0.s8 %v1139
        %v1141 = vlaneseq
        %v1142 = vshrl.u32 %v1141, 7
        %v1143 = vsub.s32 %v1140, %v1142
        %v1144 = vrot.slane %v1130, %v1143
        %v1145 = vcombine.high %v1137, 0.0
        %v1147 = vunpack.c.l.s4 1934713408
        %v1148 = vunpack.c.0.s8 %v1147
        %v1149 = vlaneseq
        %v1150 = vshrl.u32 %v1149, 7
        %v1151 = vsub.s32 %v1148, %v1150
        %v1152 = vrot.slane %v1137, %v1151
        %v1154 = vunpack.c.l.s4 1934713408
        %v1155 = vunpack.c.0.s8 %v1154
        %v1156 = vlaneseq
        %v1157 = vshrl.u32 %v1156, 7
        %v1158 = vsub.s32 %v1155, %v1157
        %v1159 = vrot.slane %v1145, %v1158
        %v1160 = vcombine.high %v1144, 0.0
        %v1162 = vunpack.c.l.s4 1934713408
        %v1163 = vunpack.c.0.s8 %v1162
        %v1164 = vlaneseq
        %v1165 = vshrl.u32 %v1164, 7
        %v1166 = vsub.s32 %v1163, %v1165
        %v1167 = vrot.slane %v1144, %v1166
        %v1169 = vunpack.c.l.s4 1934713408
        %v1170 = vunpack.c.0.s8 %v1169
        %v1171 = vlaneseq
        %v1172 = vshrl.u32 %v1171, 7
        %v1173 = vsub.s32 %v1170, %v1172
        %v1174 = vrot.slane %v1160, %v1173
        %v1175 = vcombine.high %v1152, 0.0
        %v1176 = vcombine.high %v1159, 0.0
        %v1177 = vcombine.high %v1167, 0.0
        %v1178 = vcombine.high %v1174, 0.0
        %v1179 = vcombine.high %v268, 0.0
        %v1181 = vunpack.c.l.s4 1983009808
        %v1182 = vunpack.c.0.s8 %v1181
        %v1183 = vlaneseq
        %v1184 = vshrl.u32 %v1183, 7
        %v1185 = vsub.s32 %v1182, %v1184
        %v1186 = vrot.slane %v268, %v1185
        %v1188 = vunpack.c.l.s4 1983009808
        %v1189 = vunpack.c.0.s8 %v1188
        %v1190 = vlaneseq
        %v1191 = vshrl.u32 %v1190, 7
        %v1192 = vsub.s32 %v1189, %v1191
        %v1193 = vrot.slane %v1179, %v1192
        %v1194 = vcombine.high %v1186, 0.0
        %v1196 = vunpack.c.l.s4 1934713408
        %v1197 = vunpack.c.0.s8 %v1196
        %v1198 = vlaneseq
        %v1199 = vshrl.u32 %v1198, 7
        %v1200 = vsub.s32 %v1197, %v1199
        %v1201 = vrot.slane %v1186, %v1200
        %v1203 = vunpack.c.l.s4 1934713408
        %v1204 = vunpack.c.0.s8 %v1203
        %v1205 = vlaneseq
        %v1206 = vshrl.u32 %v1205, 7
        %v1207 = vsub.s32 %v1204, %v1206
        %v1208 = vrot.slane %v1194, %v1207
        %v1209 = vcombine.high %v1193, 0.0
        %v1211 = vunpack.c.l.s4 1934713408
        %v1212 = vunpack.c.0.s8 %v1211
        %v1213 = vlaneseq
        %v1214 = vshrl.u32 %v1213, 7
        %v1215 = vsub.s32 %v1212, %v1214
        %v1216 = vrot.slane %v1193, %v1215
        %v1218 = vunpack.c.l.s4 1934713408
        %v1219 = vunpack.c.0.s8 %v1218
        %v1220 = vlaneseq
        %v1221 = vshrl.u32 %v1220, 7
        %v1222 = vsub.s32 %v1219, %v1221
        %v1223 = vrot.slane %v1209, %v1222
        %v1224 = vcombine.high %v1201, 0.0
        %v1225 = vcombine.high %v1208, 0.0
        %v1226 = vcombine.high %v1216, 0.0
        %v1227 = vcombine.high %v1223, 0.0
        %v1228 = vcombine.high %v275, 0.0
        %v1230 = vunpack.c.l.s4 1983009808
        %v1231 = vunpack.c.0.s8 %v1230
        %v1232 = vlaneseq
        %v1233 = vshrl.u32 %v1232, 7
        %v1234 = vsub.s32 %v1231, %v1233
        %v1235 = vrot.slane %v275, %v1234
        %v1237 = vunpack.c.l.s4 1983009808
        %v1238 = vunpack.c.0.s8 %v1237
        %v1239 = vlaneseq
        %v1240 = vshrl.u32 %v1239, 7
        %v1241 = vsub.s32 %v1238, %v1240
        %v1242 = vrot.slane %v1228, %v1241
        %v1243 = vcombine.high %v1235, 0.0
        %v1245 = vunpack.c.l.s4 1934713408
        %v1246 = vunpack.c.0.s8 %v1245
        %v1247 = vlaneseq
        %v1248 = vshrl.u32 %v1247, 7
        %v1249 = vsub.s32 %v1246, %v1248
        %v1250 = vrot.slane %v1235, %v1249
        %v1252 = vunpack.c.l.s4 1934713408
        %v1253 = vunpack.c.0.s8 %v1252
        %v1254 = vlaneseq
        %v1255 = vshrl.u32 %v1254, 7
        %v1256 = vsub.s32 %v1253, %v1255
        %v1257 = vrot.slane %v1243, %v1256
        %v1258 = vcombine.high %v1242, 0.0
        %v1260 = vunpack.c.l.s4 1934713408
        %v1261 = vunpack.c.0.s8 %v1260
        %v1262 = vlaneseq
        %v1263 = vshrl.u32 %v1262, 7
        %v1264 = vsub.s32 %v1261, %v1263
        %v1265 = vrot.slane %v1242, %v1264
        %v1267 = vunpack.c.l.s4 1934713408
        %v1268 = vunpack.c.0.s8 %v1267
        %v1269 = vlaneseq
        %v1270 = vshrl.u32 %v1269, 7
        %v1271 = vsub.s32 %v1268, %v1270
        %v1272 = vrot.slane %v1258, %v1271
        %v1273 = vcombine.high %v1250, 0.0
        %v1274 = vcombine.high %v1257, 0.0
        %v1275 = vcombine.high %v1265, 0.0
        %v1276 = vcombine.high %v1272, 0.0
        %v1277 = vcombine.high %v279, 0.0
        %v1279 = vunpack.c.l.s4 1983009808
        %v1280 = vunpack.c.0.s8 %v1279
        %v1281 = vlaneseq
        %v1282 = vshrl.u32 %v1281, 7
        %v1283 = vsub.s32 %v1280, %v1282
        %v1284 = vrot.slane %v279, %v1283
        %v1286 = vunpack.c.l.s4 1983009808
        %v1287 = vunpack.c.0.s8 %v1286
        %v1288 = vlaneseq
        %v1289 = vshrl.u32 %v1288, 7
        %v1290 = vsub.s32 %v1287, %v1289
        %v1291 = vrot.slane %v1277, %v1290
        %v1292 = vcombine.high %v1284, 0.0
        %v1294 = vunpack.c.l.s4 1934713408
        %v1295 = vunpack.c.0.s8 %v1294
        %v1296 = vlaneseq
        %v1297 = vshrl.u32 %v1296, 7
        %v1298 = vsub.s32 %v1295, %v1297
        %v1299 = vrot.slane %v1284, %v1298
        %v1301 = vunpack.c.l.s4 1934713408
        %v1302 = vunpack.c.0.s8 %v1301
        %v1303 = vlaneseq
        %v1304 = vshrl.u32 %v1303, 7
        %v1305 = vsub.s32 %v1302, %v1304
        %v1306 = vrot.slane %v1292, %v1305
        %v1307 = vcombine.high %v1291, 0.0
        %v1309 = vunpack.c.l.s4 1934713408
        %v1310 = vunpack.c.0.s8 %v1309
        %v1311 = vlaneseq
        %v1312 = vshrl.u32 %v1311, 7
        %v1313 = vsub.s32 %v1310, %v1312
        %v1314 = vrot.slane %v1291, %v1313
        %v1316 = vunpack.c.l.s4 1934713408
        %v1317 = vunpack.c.0.s8 %v1316
        %v1318 = vlaneseq
        %v1319 = vshrl.u32 %v1318, 7
        %v1320 = vsub.s32 %v1317, %v1319
        %v1321 = vrot.slane %v1307, %v1320
        %v1322 = vcombine.high %v1299, 0.0
        %v1323 = vcombine.high %v1306, 0.0
        %v1324 = vcombine.high %v1314, 0.0
        %v1325 = vcombine.high %v1321, 0.0
        %v1326 = vcombine.high %v286, 0.0
        %v1328 = vunpack.c.l.s4 1983009808
        %v1329 = vunpack.c.0.s8 %v1328
        %v1330 = vlaneseq
        %v1331 = vshrl.u32 %v1330, 7
        %v1332 = vsub.s32 %v1329, %v1331
        %v1333 = vrot.slane %v286, %v1332
        %v1335 = vunpack.c.l.s4 1983009808
        %v1336 = vunpack.c.0.s8 %v1335
        %v1337 = vlaneseq
        %v1338 = vshrl.u32 %v1337, 7
        %v1339 = vsub.s32 %v1336, %v1338
        %v1340 = vrot.slane %v1326, %v1339
        %v1341 = vcombine.high %v1333, 0.0
        %v1343 = vunpack.c.l.s4 1934713408
        %v1344 = vunpack.c.0.s8 %v1343
        %v1345 = vlaneseq
        %v1346 = vshrl.u32 %v1345, 7
        %v1347 = vsub.s32 %v1344, %v1346
        %v1348 = vrot.slane %v1333, %v1347
        %v1350 = vunpack.c.l.s4 1934713408
        %v1351 = vunpack.c.0.s8 %v1350
        %v1352 = vlaneseq
        %v1353 = vshrl.u32 %v1352, 7
        %v1354 = vsub.s32 %v1351, %v1353
        %v1355 = vrot.slane %v1341, %v1354
        %v1356 = vcombine.high %v1340, 0.0
        %v1358 = vunpack.c.l.s4 1934713408
        %v1359 = vunpack.c.0.s8 %v1358
        %v1360 = vlaneseq
        %v1361 = vshrl.u32 %v1360, 7
        %v1362 = vsub.s32 %v1359, %v1361
        %v1363 = vrot.slane %v1340, %v1362
        %v1365 = vunpack.c.l.s4 1934713408
        %v1366 = vunpack.c.0.s8 %v1365
        %v1367 = vlaneseq
        %v1368 = vshrl.u32 %v1367, 7
        %v1369 = vsub.s32 %v1366, %v1368
        %v1370 = vrot.slane %v1356, %v1369
        %v1371 = vcombine.high %v1348, 0.0
        %v1372 = vcombine.high %v1355, 0.0
        %v1373 = vcombine.high %v1363, 0.0
        %v1374 = vcombine.high %v1370, 0.0
        %v1375 = vcombine.high %v290, 0.0
        %v1377 = vunpack.c.l.s4 1983009808
        %v1378 = vunpack.c.0.s8 %v1377
        %v1379 = vlaneseq
        %v1380 = vshrl.u32 %v1379, 7
        %v1381 = vsub.s32 %v1378, %v1380
        %v1382 = vrot.slane %v290, %v1381
        %v1384 = vunpack.c.l.s4 1983009808
        %v1385 = vunpack.c.0.s8 %v1384
        %v1386 = vlaneseq
        %v1387 = vshrl.u32 %v1386, 7
        %v1388 = vsub.s32 %v1385, %v1387
        %v1389 = vrot.slane %v1375, %v1388
        %v1390 = vcombine.high %v1382, 0.0
        %v1392 = vunpack.c.l.s4 1934713408
        %v1393 = vunpack.c.0.s8 %v1392
        %v1394 = vlaneseq
        %v1395 = vshrl.u32 %v1394, 7
        %v1396 = vsub.s32 %v1393, %v1395
        %v1397 = vrot.slane %v1382, %v1396
        %v1399 = vunpack.c.l.s4 1934713408
        %v1400 = vunpack.c.0.s8 %v1399
        %v1401 = vlaneseq
        %v1402 = vshrl.u32 %v1401, 7
        %v1403 = vsub.s32 %v1400, %v1402
        %v1404 = vrot.slane %v1390, %v1403
        %v1405 = vcombine.high %v1389, 0.0
        %v1407 = vunpack.c.l.s4 1934713408
        %v1408 = vunpack.c.0.s8 %v1407
        %v1409 = vlaneseq
        %v1410 = vshrl.u32 %v1409, 7
        %v1411 = vsub.s32 %v1408, %v1410
        %v1412 = vrot.slane %v1389, %v1411
        %v1414 = vunpack.c.l.s4 1934713408
        %v1415 = vunpack.c.0.s8 %v1414
        %v1416 = vlaneseq
        %v1417 = vshrl.u32 %v1416, 7
        %v1418 = vsub.s32 %v1415, %v1417
        %v1419 = vrot.slane %v1405, %v1418
        %v1420 = vcombine.high %v1397, 0.0
        %v1421 = vcombine.high %v1404, 0.0
        %v1422 = vcombine.high %v1412, 0.0
        %v1423 = vcombine.high %v1419, 0.0
        %v1424 = vcombine.high %v297, 0.0
        %v1426 = vunpack.c.l.s4 1983009808
        %v1427 = vunpack.c.0.s8 %v1426
        %v1428 = vlaneseq
        %v1429 = vshrl.u32 %v1428, 7
        %v1430 = vsub.s32 %v1427, %v1429
        %v1431 = vrot.slane %v297, %v1430
        %v1433 = vunpack.c.l.s4 1983009808
        %v1434 = vunpack.c.0.s8 %v1433
        %v1435 = vlaneseq
        %v1436 = vshrl.u32 %v1435, 7
        %v1437 = vsub.s32 %v1434, %v1436
        %v1438 = vrot.slane %v1424, %v1437
        %v1439 = vcombine.high %v1431, 0.0
        %v1441 = vunpack.c.l.s4 1934713408
        %v1442 = vunpack.c.0.s8 %v1441
        %v1443 = vlaneseq
        %v1444 = vshrl.u32 %v1443, 7
        %v1445 = vsub.s32 %v1442, %v1444
        %v1446 = vrot.slane %v1431, %v1445
        %v1448 = vunpack.c.l.s4 1934713408
        %v1449 = vunpack.c.0.s8 %v1448
        %v1450 = vlaneseq
        %v1451 = vshrl.u32 %v1450, 7
        %v1452 = vsub.s32 %v1449, %v1451
        %v1453 = vrot.slane %v1439, %v1452
        %v1454 = vcombine.high %v1438, 0.0
        %v1456 = vunpack.c.l.s4 1934713408
        %v1457 = vunpack.c.0.s8 %v1456
        %v1458 = vlaneseq
        %v1459 = vshrl.u32 %v1458, 7
        %v1460 = vsub.s32 %v1457, %v1459
        %v1461 = vrot.slane %v1438, %v1460
        %v1463 = vunpack.c.l.s4 1934713408
        %v1464 = vunpack.c.0.s8 %v1463
        %v1465 = vlaneseq
        %v1466 = vshrl.u32 %v1465, 7
        %v1467 = vsub.s32 %v1464, %v1466
        %v1468 = vrot.slane %v1454, %v1467
        %v1469 = vcombine.high %v1446, 0.0
        %v1470 = vcombine.high %v1453, 0.0
        %v1471 = vcombine.high %v1461, 0.0
        %v1472 = vcombine.high %v1468, 0.0
        %v1473 = vcombine.high %v301, 0.0
        %v1475 = vunpack.c.l.s4 1983009808
        %v1476 = vunpack.c.0.s8 %v1475
        %v1477 = vlaneseq
        %v1478 = vshrl.u32 %v1477, 7
        %v1479 = vsub.s32 %v1476, %v1478
        %v1480 = vrot.slane %v301, %v1479
        %v1482 = vunpack.c.l.s4 1983009808
        %v1483 = vunpack.c.0.s8 %v1482
        %v1484 = vlaneseq
        %v1485 = vshrl.u32 %v1484, 7
        %v1486 = vsub.s32 %v1483, %v1485
        %v1487 = vrot.slane %v1473, %v1486
        %v1488 = vcombine.high %v1480, 0.0
        %v1490 = vunpack.c.l.s4 1934713408
        %v1491 = vunpack.c.0.s8 %v1490
        %v1492 = vlaneseq
        %v1493 = vshrl.u32 %v1492, 7
        %v1494 = vsub.s32 %v1491, %v1493
        %v1495 = vrot.slane %v1480, %v1494
        %v1497 = vunpack.c.l.s4 1934713408
        %v1498 = vunpack.c.0.s8 %v1497
        %v1499 = vlaneseq
        %v1500 = vshrl.u32 %v1499, 7
        %v1501 = vsub.s32 %v1498, %v1500
        %v1502 = vrot.slane %v1488, %v1501
        %v1503 = vcombine.high %v1487, 0.0
        %v1505 = vunpack.c.l.s4 1934713408
        %v1506 = vunpack.c.0.s8 %v1505
        %v1507 = vlaneseq
        %v1508 = vshrl.u32 %v1507, 7
        %v1509 = vsub.s32 %v1506, %v1508
        %v1510 = vrot.slane %v1487, %v1509
        %v1512 = vunpack.c.l.s4 1934713408
        %v1513 = vunpack.c.0.s8 %v1512
        %v1514 = vlaneseq
        %v1515 = vshrl.u32 %v1514, 7
        %v1516 = vsub.s32 %v1513, %v1515
        %v1517 = vrot.slane %v1503, %v1516
        %v1518 = vcombine.high %v1495, 0.0
        %v1519 = vcombine.high %v1502, 0.0
        %v1520 = vcombine.high %v1510, 0.0
        %v1521 = vcombine.high %v1517, 0.0
        %v1522 = vcombine.high %v308, 0.0
        %v1524 = vunpack.c.l.s4 1983009808
        %v1525 = vunpack.c.0.s8 %v1524
        %v1526 = vlaneseq
        %v1527 = vshrl.u32 %v1526, 7
        %v1528 = vsub.s32 %v1525, %v1527
        %v1529 = vrot.slane %v308, %v1528
        %v1531 = vunpack.c.l.s4 1983009808
        %v1532 = vunpack.c.0.s8 %v1531
        %v1533 = vlaneseq
        %v1534 = vshrl.u32 %v1533, 7
        %v1535 = vsub.s32 %v1532, %v1534
        %v1536 = vrot.slane %v1522, %v1535
        %v1537 = vcombine.high %v1529, 0.0
        %v1539 = vunpack.c.l.s4 1934713408
        %v1540 = vunpack.c.0.s8 %v1539
        %v1541 = vlaneseq
        %v1542 = vshrl.u32 %v1541, 7
        %v1543 = vsub.s32 %v1540, %v1542
        %v1544 = vrot.slane %v1529, %v1543
        %v1546 = vunpack.c.l.s4 1934713408
        %v1547 = vunpack.c.0.s8 %v1546
        %v1548 = vlaneseq
        %v1549 = vshrl.u32 %v1548, 7
        %v1550 = vsub.s32 %v1547, %v1549
        %v1551 = vrot.slane %v1537, %v1550
        %v1552 = vcombine.high %v1536, 0.0
        %v1554 = vunpack.c.l.s4 1934713408
        %v1555 = vunpack.c.0.s8 %v1554
        %v1556 = vlaneseq
        %v1557 = vshrl.u32 %v1556, 7
        %v1558 = vsub.s32 %v1555, %v1557
        %v1559 = vrot.slane %v1536, %v1558
        %v1561 = vunpack.c.l.s4 1934713408
        %v1562 = vunpack.c.0.s8 %v1561
        %v1563 = vlaneseq
        %v1564 = vshrl.u32 %v1563, 7
        %v1565 = vsub.s32 %v1562, %v1564
        %v1566 = vrot.slane %v1552, %v1565
        %v1567 = vcombine.high %v1544, 0.0
        %v1568 = vcombine.high %v1551, 0.0
        %v1569 = vcombine.high %v1559, 0.0
        %v1570 = vcombine.high %v1566, 0.0
        %v1571 = vcombine.high %v312, 0.0
        %v1573 = vunpack.c.l.s4 1983009808
        %v1574 = vunpack.c.0.s8 %v1573
        %v1575 = vlaneseq
        %v1576 = vshrl.u32 %v1575, 7
        %v1577 = vsub.s32 %v1574, %v1576
        %v1578 = vrot.slane %v312, %v1577
        %v1580 = vunpack.c.l.s4 1983009808
        %v1581 = vunpack.c.0.s8 %v1580
        %v1582 = vlaneseq
        %v1583 = vshrl.u32 %v1582, 7
        %v1584 = vsub.s32 %v1581, %v1583
        %v1585 = vrot.slane %v1571, %v1584
        %v1586 = vcombine.high %v1578, 0.0
        %v1588 = vunpack.c.l.s4 1934713408
        %v1589 = vunpack.c.0.s8 %v1588
        %v1590 = vlaneseq
        %v1591 = vshrl.u32 %v1590, 7
        %v1592 = vsub.s32 %v1589, %v1591
        %v1593 = vrot.slane %v1578, %v1592
        %v1595 = vunpack.c.l.s4 1934713408
        %v1596 = vunpack.c.0.s8 %v1595
        %v1597 = vlaneseq
        %v1598 = vshrl.u32 %v1597, 7
        %v1599 = vsub.s32 %v1596, %v1598
        %v1600 = vrot.slane %v1586, %v1599
        %v1601 = vcombine.high %v1585, 0.0
        %v1603 = vunpack.c.l.s4 1934713408
        %v1604 = vunpack.c.0.s8 %v1603
        %v1605 = vlaneseq
        %v1606 = vshrl.u32 %v1605, 7
        %v1607 = vsub.s32 %v1604, %v1606
        %v1608 = vrot.slane %v1585, %v1607
        %v1610 = vunpack.c.l.s4 1934713408
        %v1611 = vunpack.c.0.s8 %v1610
        %v1612 = vlaneseq
        %v1613 = vshrl.u32 %v1612, 7
        %v1614 = vsub.s32 %v1611, %v1613
        %v1615 = vrot.slane %v1601, %v1614
        %v1616 = vcombine.high %v1593, 0.0
        %v1617 = vcombine.high %v1600, 0.0
        %v1618 = vcombine.high %v1608, 0.0
        %v1619 = vcombine.high %v1615, 0.0
        %v1620 = vcombine.high %v319, 0.0
        %v1622 = vunpack.c.l.s4 1983009808
        %v1623 = vunpack.c.0.s8 %v1622
        %v1624 = vlaneseq
        %v1625 = vshrl.u32 %v1624, 7
        %v1626 = vsub.s32 %v1623, %v1625
        %v1627 = vrot.slane %v319, %v1626
        %v1629 = vunpack.c.l.s4 1983009808
        %v1630 = vunpack.c.0.s8 %v1629
        %v1631 = vlaneseq
        %v1632 = vshrl.u32 %v1631, 7
        %v1633 = vsub.s32 %v1630, %v1632
        %v1634 = vrot.slane %v1620, %v1633
        %v1635 = vcombine.high %v1627, 0.0
        %v1637 = vunpack.c.l.s4 1934713408
        %v1638 = vunpack.c.0.s8 %v1637
        %v1639 = vlaneseq
        %v1640 = vshrl.u32 %v1639, 7
        %v1641 = vsub.s32 %v1638, %v1640
        %v1642 = vrot.slane %v1627, %v1641
        %v1644 = vunpack.c.l.s4 1934713408
        %v1645 = vunpack.c.0.s8 %v1644
        %v1646 = vlaneseq
        %v1647 = vshrl.u32 %v1646, 7
        %v1648 = vsub.s32 %v1645, %v1647
        %v1649 = vrot.slane %v1635, %v1648
        %v1650 = vcombine.high %v1634, 0.0
        %v1652 = vunpack.c.l.s4 1934713408
        %v1653 = vunpack.c.0.s8 %v1652
        %v1654 = vlaneseq
        %v1655 = vshrl.u32 %v1654, 7
        %v1656 = vsub.s32 %v1653, %v1655
        %v1657 = vrot.slane %v1634, %v1656
        %v1659 = vunpack.c.l.s4 1934713408
        %v1660 = vunpack.c.0.s8 %v1659
        %v1661 = vlaneseq
        %v1662 = vshrl.u32 %v1661, 7
        %v1663 = vsub.s32 %v1660, %v1662
        %v1664 = vrot.slane %v1650, %v1663
        %v1665 = vcombine.high %v1642, 0.0
        %v1666 = vcombine.high %v1649, 0.0
        %v1667 = vcombine.high %v1657, 0.0
        %v1668 = vcombine.high %v1664, 0.0
        %v1669 = vcombine.high %v323, 0.0
        %v1671 = vunpack.c.l.s4 1983009808
        %v1672 = vunpack.c.0.s8 %v1671
        %v1673 = vlaneseq
        %v1674 = vshrl.u32 %v1673, 7
        %v1675 = vsub.s32 %v1672, %v1674
        %v1676 = vrot.slane %v323, %v1675
        %v1678 = vunpack.c.l.s4 1983009808
        %v1679 = vunpack.c.0.s8 %v1678
        %v1680 = vlaneseq
        %v1681 = vshrl.u32 %v1680, 7
        %v1682 = vsub.s32 %v1679, %v1681
        %v1683 = vrot.slane %v1669, %v1682
        %v1684 = vcombine.high %v1676, 0.0
        %v1686 = vunpack.c.l.s4 1934713408
        %v1687 = vunpack.c.0.s8 %v1686
        %v1688 = vlaneseq
        %v1689 = vshrl.u32 %v1688, 7
        %v1690 = vsub.s32 %v1687, %v1689
        %v1691 = vrot.slane %v1676, %v1690
        %v1693 = vunpack.c.l.s4 1934713408
        %v1694 = vunpack.c.0.s8 %v1693
        %v1695 = vlaneseq
        %v1696 = vshrl.u32 %v1695, 7
        %v1697 = vsub.s32 %v1694, %v1696
        %v1698 = vrot.slane %v1684, %v1697
        %v1699 = vcombine.high %v1683, 0.0
        %v1701 = vunpack.c.l.s4 1934713408
        %v1702 = vunpack.c.0.s8 %v1701
        %v1703 = vlaneseq
        %v1704 = vshrl.u32 %v1703, 7
        %v1705 = vsub.s32 %v1702, %v1704
        %v1706 = vrot.slane %v1683, %v1705
        %v1708 = vunpack.c.l.s4 1934713408
        %v1709 = vunpack.c.0.s8 %v1708
        %v1710 = vlaneseq
        %v1711 = vshrl.u32 %v1710, 7
        %v1712 = vsub.s32 %v1709, %v1711
        %v1713 = vrot.slane %v1699, %v1712
        %v1714 = vcombine.high %v1691, 0.0
        %v1715 = vcombine.high %v1698, 0.0
        %v1716 = vcombine.high %v1706, 0.0
        %v1717 = vcombine.high %v1713, 0.0
        %v1718 = vcombine.high %v330, 0.0
        %v1720 = vunpack.c.l.s4 1983009808
        %v1721 = vunpack.c.0.s8 %v1720
        %v1722 = vlaneseq
        %v1723 = vshrl.u32 %v1722, 7
        %v1724 = vsub.s32 %v1721, %v1723
        %v1725 = vrot.slane %v330, %v1724
        %v1727 = vunpack.c.l.s4 1983009808
        %v1728 = vunpack.c.0.s8 %v1727
        %v1729 = vlaneseq
        %v1730 = vshrl.u32 %v1729, 7
        %v1731 = vsub.s32 %v1728, %v1730
        %v1732 = vrot.slane %v1718, %v1731
        %v1733 = vcombine.high %v1725, 0.0
        %v1735 = vunpack.c.l.s4 1934713408
        %v1736 = vunpack.c.0.s8 %v1735
        %v1737 = vlaneseq
        %v1738 = vshrl.u32 %v1737, 7
        %v1739 = vsub.s32 %v1736, %v1738
        %v1740 = vrot.slane %v1725, %v1739
        %v1742 = vunpack.c.l.s4 1934713408
        %v1743 = vunpack.c.0.s8 %v1742
        %v1744 = vlaneseq
        %v1745 = vshrl.u32 %v1744, 7
        %v1746 = vsub.s32 %v1743, %v1745
        %v1747 = vrot.slane %v1733, %v1746
        %v1748 = vcombine.high %v1732, 0.0
        %v1750 = vunpack.c.l.s4 1934713408
        %v1751 = vunpack.c.0.s8 %v1750
        %v1752 = vlaneseq
        %v1753 = vshrl.u32 %v1752, 7
        %v1754 = vsub.s32 %v1751, %v1753
        %v1755 = vrot.slane %v1732, %v1754
        %v1757 = vunpack.c.l.s4 1934713408
        %v1758 = vunpack.c.0.s8 %v1757
        %v1759 = vlaneseq
        %v1760 = vshrl.u32 %v1759, 7
        %v1761 = vsub.s32 %v1758, %v1760
        %v1762 = vrot.slane %v1748, %v1761
        %v1763 = vcombine.high %v1740, 0.0
        %v1764 = vcombine.high %v1747, 0.0
        %v1765 = vcombine.high %v1755, 0.0
        %v1766 = vcombine.high %v1762, 0.0
        %v1767 = vcombine.high %v334, 0.0
        %v1769 = vunpack.c.l.s4 1983009808
        %v1770 = vunpack.c.0.s8 %v1769
        %v1771 = vlaneseq
        %v1772 = vshrl.u32 %v1771, 7
        %v1773 = vsub.s32 %v1770, %v1772
        %v1774 = vrot.slane %v334, %v1773
        %v1776 = vunpack.c.l.s4 1983009808
        %v1777 = vunpack.c.0.s8 %v1776
        %v1778 = vlaneseq
        %v1779 = vshrl.u32 %v1778, 7
        %v1780 = vsub.s32 %v1777, %v1779
        %v1781 = vrot.slane %v1767, %v1780
        %v1782 = vcombine.high %v1774, 0.0
        %v1784 = vunpack.c.l.s4 1934713408
        %v1785 = vunpack.c.0.s8 %v1784
        %v1786 = vlaneseq
        %v1787 = vshrl.u32 %v1786, 7
        %v1788 = vsub.s32 %v1785, %v1787
        %v1789 = vrot.slane %v1774, %v1788
        %v1791 = vunpack.c.l.s4 1934713408
        %v1792 = vunpack.c.0.s8 %v1791
        %v1793 = vlaneseq
        %v1794 = vshrl.u32 %v1793, 7
        %v1795 = vsub.s32 %v1792, %v1794
        %v1796 = vrot.slane %v1782, %v1795
        %v1797 = vcombine.high %v1781, 0.0
        %v1799 = vunpack.c.l.s4 1934713408
        %v1800 = vunpack.c.0.s8 %v1799
        %v1801 = vlaneseq
        %v1802 = vshrl.u32 %v1801, 7
        %v1803 = vsub.s32 %v1800, %v1802
        %v1804 = vrot.slane %v1781, %v1803
        %v1806 = vunpack.c.l.s4 1934713408
        %v1807 = vunpack.c.0.s8 %v1806
        %v1808 = vlaneseq
        %v1809 = vshrl.u32 %v1808, 7
        %v1810 = vsub.s32 %v1807, %v1809
        %v1811 = vrot.slane %v1797, %v1810
        %v1812 = vcombine.high %v1789, 0.0
        %v1813 = vcombine.high %v1796, 0.0
        %v1814 = vcombine.high %v1804, 0.0
        %v1815 = vcombine.high %v1811, 0.0
        %v1816 = vcombine.high %v341, 0.0
        %v1818 = vunpack.c.l.s4 1983009808
        %v1819 = vunpack.c.0.s8 %v1818
        %v1820 = vlaneseq
        %v1821 = vshrl.u32 %v1820, 7
        %v1822 = vsub.s32 %v1819, %v1821
        %v1823 = vrot.slane %v341, %v1822
        %v1825 = vunpack.c.l.s4 1983009808
        %v1826 = vunpack.c.0.s8 %v1825
        %v1827 = vlaneseq
        %v1828 = vshrl.u32 %v1827, 7
        %v1829 = vsub.s32 %v1826, %v1828
        %v1830 = vrot.slane %v1816, %v1829
        %v1831 = vcombine.high %v1823, 0.0
        %v1833 = vunpack.c.l.s4 1934713408
        %v1834 = vunpack.c.0.s8 %v1833
        %v1835 = vlaneseq
        %v1836 = vshrl.u32 %v1835, 7
        %v1837 = vsub.s32 %v1834, %v1836
        %v1838 = vrot.slane %v1823, %v1837
        %v1840 = vunpack.c.l.s4 1934713408
        %v1841 = vunpack.c.0.s8 %v1840
        %v1842 = vlaneseq
        %v1843 = vshrl.u32 %v1842, 7
        %v1844 = vsub.s32 %v1841, %v1843
        %v1845 = vrot.slane %v1831, %v1844
        %v1846 = vcombine.high %v1830, 0.0
        %v1848 = vunpack.c.l.s4 1934713408
        %v1849 = vunpack.c.0.s8 %v1848
        %v1850 = vlaneseq
        %v1851 = vshrl.u32 %v1850, 7
        %v1852 = vsub.s32 %v1849, %v1851
        %v1853 = vrot.slane %v1830, %v1852
        %v1855 = vunpack.c.l.s4 1934713408
        %v1856 = vunpack.c.0.s8 %v1855
        %v1857 = vlaneseq
        %v1858 = vshrl.u32 %v1857, 7
        %v1859 = vsub.s32 %v1856, %v1858
        %v1860 = vrot.slane %v1846, %v1859
        %v1861 = vcombine.high %v1838, 0.0
        %v1862 = vcombine.high %v1845, 0.0
        %v1863 = vcombine.high %v1853, 0.0
        %v1864 = vcombine.high %v1860, 0.0
        %v1865 = vcombine.high %v345, 0.0
        %v1867 = vunpack.c.l.s4 1983009808
        %v1868 = vunpack.c.0.s8 %v1867
        %v1869 = vlaneseq
        %v1870 = vshrl.u32 %v1869, 7
        %v1871 = vsub.s32 %v1868, %v1870
        %v1872 = vrot.slane %v345, %v1871
        %v1874 = vunpack.c.l.s4 1983009808
        %v1875 = vunpack.c.0.s8 %v1874
        %v1876 = vlaneseq
        %v1877 = vshrl.u32 %v1876, 7
        %v1878 = vsub.s32 %v1875, %v1877
        %v1879 = vrot.slane %v1865, %v1878
        %v1880 = vcombine.high %v1872, 0.0
        %v1882 = vunpack.c.l.s4 1934713408
        %v1883 = vunpack.c.0.s8 %v1882
        %v1884 = vlaneseq
        %v1885 = vshrl.u32 %v1884, 7
        %v1886 = vsub.s32 %v1883, %v1885
        %v1887 = vrot.slane %v1872, %v1886
        %v1889 = vunpack.c.l.s4 1934713408
        %v1890 = vunpack.c.0.s8 %v1889
        %v1891 = vlaneseq
        %v1892 = vshrl.u32 %v1891, 7
        %v1893 = vsub.s32 %v1890, %v1892
        %v1894 = vrot.slane %v1880, %v1893
        %v1895 = vcombine.high %v1879, 0.0
        %v1897 = vunpack.c.l.s4 1934713408
        %v1898 = vunpack.c.0.s8 %v1897
        %v1899 = vlaneseq
        %v1900 = vshrl.u32 %v1899, 7
        %v1901 = vsub.s32 %v1898, %v1900
        %v1902 = vrot.slane %v1879, %v1901
        %v1904 = vunpack.c.l.s4 1934713408
        %v1905 = vunpack.c.0.s8 %v1904
        %v1906 = vlaneseq
        %v1907 = vshrl.u32 %v1906, 7
        %v1908 = vsub.s32 %v1905, %v1907
        %v1909 = vrot.slane %v1895, %v1908
        %v1910 = vcombine.high %v1887, 0.0
        %v1911 = vcombine.high %v1894, 0.0
        %v1912 = vcombine.high %v1902, 0.0
        %v1913 = vcombine.high %v1909, 0.0
        %1930 = vrot.lane.b32.xlu0 %v391, 2
        %v1931 = vpop.permute.xlu0 %1930
        %1932 = vrot.lane.b32.xlu0 %v489, 2
        %v1933 = vpop.permute.xlu0 %1932
        %1934 = vrot.lane.b32.xlu0 %v587, 2
        %v1935 = vpop.permute.xlu0 %1934
        %1936 = vrot.lane.b32.xlu0 %v685, 2
        %v1937 = vpop.permute.xlu0 %1936
        %1938 = vrot.lane.b32.xlu0 %v783, 2
        %v1939 = vpop.permute.xlu0 %1938
        %1940 = vrot.lane.b32.xlu0 %v881, 2
        %v1941 = vpop.permute.xlu0 %1940
        %1942 = vrot.lane.b32.xlu0 %v979, 2
        %v1943 = vpop.permute.xlu0 %1942
        %1944 = vrot.lane.b32.xlu0 %v1077, 2
        %v1945 = vpop.permute.xlu0 %1944
        %1946 = vrot.lane.b32.xlu0 %v1175, 2
        %v1947 = vpop.permute.xlu0 %1946
        %1948 = vrot.lane.b32.xlu0 %v1273, 2
        %v1949 = vpop.permute.xlu0 %1948
        %1950 = vrot.lane.b32.xlu0 %v1371, 2
        %v1951 = vpop.permute.xlu0 %1950
        %1952 = vrot.lane.b32.xlu0 %v1469, 2
        %v1953 = vpop.permute.xlu0 %1952
        %1954 = vrot.lane.b32.xlu0 %v1567, 2
        %v1955 = vpop.permute.xlu0 %1954
        %1956 = vrot.lane.b32.xlu0 %v1665, 2
        %v1957 = vpop.permute.xlu0 %1956
        %1958 = vrot.lane.b32.xlu0 %v1763, 2
        %v1959 = vpop.permute.xlu0 %1958
        %1960 = vrot.lane.b32.xlu0 %v1861, 2
        %v1961 = vpop.permute.xlu0 %1960
        %1994 = vrot.lane.b32.xlu0 %v375, 4
        %v1995 = vpop.permute.xlu0 %1994
        %1996 = vrot.lane.b32.xlu0 %v473, 4
        %v1997 = vpop.permute.xlu0 %1996
        %1998 = vrot.lane.b32.xlu0 %v571, 4
        %v1999 = vpop.permute.xlu0 %1998
        %2000 = vrot.lane.b32.xlu0 %v669, 4
        %v2001 = vpop.permute.xlu0 %2000
        %2002 = vrot.lane.b32.xlu0 %v767, 4
        %v2003 = vpop.permute.xlu0 %2002
        %2004 = vrot.lane.b32.xlu0 %v865, 4
        %v2005 = vpop.permute.xlu0 %2004
        %2006 = vrot.lane.b32.xlu0 %v963, 4
        %v2007 = vpop.permute.xlu0 %2006
        %2008 = vrot.lane.b32.xlu0 %v1061, 4
        %v2009 = vpop.permute.xlu0 %2008
        %2010 = vrot.lane.b32.xlu0 %v1159, 4
        %v2011 = vpop.permute.xlu0 %2010
        %2012 = vrot.lane.b32.xlu0 %v1257, 4
        %v2013 = vpop.permute.xlu0 %2012
        %2014 = vrot.lane.b32.xlu0 %v1355, 4
        %v2015 = vpop.permute.xlu0 %2014
        %2016 = vrot.lane.b32.xlu0 %v1453, 4
        %v2017 = vpop.permute.xlu0 %2016
        %2018 = vrot.lane.b32.xlu0 %v1551, 4
        %v2019 = vpop.permute.xlu0 %2018
        %2020 = vrot.lane.b32.xlu0 %v1649, 4
        %v2021 = vpop.permute.xlu0 %2020
        %2022 = vrot.lane.b32.xlu0 %v1747, 4
        %v2023 = vpop.permute.xlu0 %2022
        %2024 = vrot.lane.b32.xlu0 %v1845, 4
        %v2025 = vpop.permute.xlu0 %2024
        %2058 = vrot.lane.b32.xlu0 %v392, 6
        %v2059 = vpop.permute.xlu0 %2058
        %2060 = vrot.lane.b32.xlu0 %v490, 6
        %v2061 = vpop.permute.xlu0 %2060
        %2062 = vrot.lane.b32.xlu0 %v588, 6
        %v2063 = vpop.permute.xlu0 %2062
        %2064 = vrot.lane.b32.xlu0 %v686, 6
        %v2065 = vpop.permute.xlu0 %2064
        %2066 = vrot.lane.b32.xlu0 %v784, 6
        %v2067 = vpop.permute.xlu0 %2066
        %2068 = vrot.lane.b32.xlu0 %v882, 6
        %v2069 = vpop.permute.xlu0 %2068
        %2070 = vrot.lane.b32.xlu0 %v980, 6
        %v2071 = vpop.permute.xlu0 %2070
        %2072 = vrot.lane.b32.xlu0 %v1078, 6
        %v2073 = vpop.permute.xlu0 %2072
        %2074 = vrot.lane.b32.xlu0 %v1176, 6
        %v2075 = vpop.permute.xlu0 %2074
        %2076 = vrot.lane.b32.xlu0 %v1274, 6
        %v2077 = vpop.permute.xlu0 %2076
        %2078 = vrot.lane.b32.xlu0 %v1372, 6
        %v2079 = vpop.permute.xlu0 %2078
        %2080 = vrot.lane.b32.xlu0 %v1470, 6
        %v2081 = vpop.permute.xlu0 %2080
        %2082 = vrot.lane.b32.xlu0 %v1568, 6
        %v2083 = vpop.permute.xlu0 %2082
        %2084 = vrot.lane.b32.xlu0 %v1666, 6
        %v2085 = vpop.permute.xlu0 %2084
        %2086 = vrot.lane.b32.xlu0 %v1764, 6
        %v2087 = vpop.permute.xlu0 %2086
        %2088 = vrot.lane.b32.xlu0 %v1862, 6
        %v2089 = vpop.permute.xlu0 %2088
        %2122 = vrot.lane.b32.xlu0 %v383, 8
        %v2123 = vpop.permute.xlu0 %2122
        %2124 = vrot.lane.b32.xlu0 %v481, 8
        %v2125 = vpop.permute.xlu0 %2124
        %2126 = vrot.lane.b32.xlu0 %v579, 8
        %v2127 = vpop.permute.xlu0 %2126
        %2128 = vrot.lane.b32.xlu0 %v677, 8
        %v2129 = vpop.permute.xlu0 %2128
        %2130 = vrot.lane.b32.xlu0 %v775, 8
        %v2131 = vpop.permute.xlu0 %2130
        %2132 = vrot.lane.b32.xlu0 %v873, 8
        %v2133 = vpop.permute.xlu0 %2132
        %2134 = vrot.lane.b32.xlu0 %v971, 8
        %v2135 = vpop.permute.xlu0 %2134
        %2136 = vrot.lane.b32.xlu0 %v1069, 8
        %v2137 = vpop.permute.xlu0 %2136
        %2138 = vrot.lane.b32.xlu0 %v1167, 8
        %v2139 = vpop.permute.xlu0 %2138
        %2140 = vrot.lane.b32.xlu0 %v1265, 8
        %v2141 = vpop.permute.xlu0 %2140
        %2142 = vrot.lane.b32.xlu0 %v1363, 8
        %v2143 = vpop.permute.xlu0 %2142
        %2144 = vrot.lane.b32.xlu0 %v1461, 8
        %v2145 = vpop.permute.xlu0 %2144
        %2146 = vrot.lane.b32.xlu0 %v1559, 8
        %v2147 = vpop.permute.xlu0 %2146
        %2148 = vrot.lane.b32.xlu0 %v1657, 8
        %v2149 = vpop.permute.xlu0 %2148
        %2150 = vrot.lane.b32.xlu0 %v1755, 8
        %v2151 = vpop.permute.xlu0 %2150
        %2152 = vrot.lane.b32.xlu0 %v1853, 8
        %v2153 = vpop.permute.xlu0 %2152
        %2186 = vrot.lane.b32.xlu0 %v393, 10
        %v2187 = vpop.permute.xlu0 %2186
        %2188 = vrot.lane.b32.xlu0 %v491, 10
        %v2189 = vpop.permute.xlu0 %2188
        %2190 = vrot.lane.b32.xlu0 %v589, 10
        %v2191 = vpop.permute.xlu0 %2190
        %2192 = vrot.lane.b32.xlu0 %v687, 10
        %v2193 = vpop.permute.xlu0 %2192
        %2194 = vrot.lane.b32.xlu0 %v785, 10
        %v2195 = vpop.permute.xlu0 %2194
        %2196 = vrot.lane.b32.xlu0 %v883, 10
        %v2197 = vpop.permute.xlu0 %2196
        %2198 = vrot.lane.b32.xlu0 %v981, 10
        %v2199 = vpop.permute.xlu0 %2198
        %2200 = vrot.lane.b32.xlu0 %v1079, 10
        %v2201 = vpop.permute.xlu0 %2200
        %2202 = vrot.lane.b32.xlu0 %v1177, 10
        %v2203 = vpop.permute.xlu0 %2202
        %2204 = vrot.lane.b32.xlu0 %v1275, 10
        %v2205 = vpop.permute.xlu0 %2204
        %2206 = vrot.lane.b32.xlu0 %v1373, 10
        %v2207 = vpop.permute.xlu0 %2206
        %2208 = vrot.lane.b32.xlu0 %v1471, 10
        %v2209 = vpop.permute.xlu0 %2208
        %2210 = vrot.lane.b32.xlu0 %v1569, 10
        %v2211 = vpop.permute.xlu0 %2210
        %2212 = vrot.lane.b32.xlu0 %v1667, 10
        %v2213 = vpop.permute.xlu0 %2212
        %2214 = vrot.lane.b32.xlu0 %v1765, 10
        %v2215 = vpop.permute.xlu0 %2214
        %2216 = vrot.lane.b32.xlu0 %v1863, 10
        %v2217 = vpop.permute.xlu0 %2216
        %2250 = vrot.lane.b32.xlu0 %v390, 12
        %v2251 = vpop.permute.xlu0 %2250
        %2252 = vrot.lane.b32.xlu0 %v488, 12
        %v2253 = vpop.permute.xlu0 %2252
        %2254 = vrot.lane.b32.xlu0 %v586, 12
        %v2255 = vpop.permute.xlu0 %2254
        %2256 = vrot.lane.b32.xlu0 %v684, 12
        %v2257 = vpop.permute.xlu0 %2256
        %2258 = vrot.lane.b32.xlu0 %v782, 12
        %v2259 = vpop.permute.xlu0 %2258
        %2260 = vrot.lane.b32.xlu0 %v880, 12
        %v2261 = vpop.permute.xlu0 %2260
        %2262 = vrot.lane.b32.xlu0 %v978, 12
        %v2263 = vpop.permute.xlu0 %2262
        %2264 = vrot.lane.b32.xlu0 %v1076, 12
        %v2265 = vpop.permute.xlu0 %2264
        %2266 = vrot.lane.b32.xlu0 %v1174, 12
        %v2267 = vpop.permute.xlu0 %2266
        %2268 = vrot.lane.b32.xlu0 %v1272, 12
        %v2269 = vpop.permute.xlu0 %2268
        %2270 = vrot.lane.b32.xlu0 %v1370, 12
        %v2271 = vpop.permute.xlu0 %2270
        %2272 = vrot.lane.b32.xlu0 %v1468, 12
        %v2273 = vpop.permute.xlu0 %2272
        %2274 = vrot.lane.b32.xlu0 %v1566, 12
        %v2275 = vpop.permute.xlu0 %2274
        %2276 = vrot.lane.b32.xlu0 %v1664, 12
        %v2277 = vpop.permute.xlu0 %2276
        %2278 = vrot.lane.b32.xlu0 %v1762, 12
        %v2279 = vpop.permute.xlu0 %2278
        %2280 = vrot.lane.b32.xlu0 %v1860, 12
        %v2281 = vpop.permute.xlu0 %2280
        %2314 = vrot.lane.b32.xlu0 %v394, 14
        %v2315 = vpop.permute.xlu0 %2314
        %2316 = vrot.lane.b32.xlu0 %v492, 14
        %v2317 = vpop.permute.xlu0 %2316
        %2318 = vrot.lane.b32.xlu0 %v590, 14
        %v2319 = vpop.permute.xlu0 %2318
        %2320 = vrot.lane.b32.xlu0 %v688, 14
        %v2321 = vpop.permute.xlu0 %2320
        %2322 = vrot.lane.b32.xlu0 %v786, 14
        %v2323 = vpop.permute.xlu0 %2322
        %2324 = vrot.lane.b32.xlu0 %v884, 14
        %v2325 = vpop.permute.xlu0 %2324
        %2326 = vrot.lane.b32.xlu0 %v982, 14
        %v2327 = vpop.permute.xlu0 %2326
        %2328 = vrot.lane.b32.xlu0 %v1080, 14
        %v2329 = vpop.permute.xlu0 %2328
        %2330 = vrot.lane.b32.xlu0 %v1178, 14
        %v2331 = vpop.permute.xlu0 %2330
        %2332 = vrot.lane.b32.xlu0 %v1276, 14
        %v2333 = vpop.permute.xlu0 %2332
        %2334 = vrot.lane.b32.xlu0 %v1374, 14
        %v2335 = vpop.permute.xlu0 %2334
        %2336 = vrot.lane.b32.xlu0 %v1472, 14
        %v2337 = vpop.permute.xlu0 %2336
        %2338 = vrot.lane.b32.xlu0 %v1570, 14
        %v2339 = vpop.permute.xlu0 %2338
        %2340 = vrot.lane.b32.xlu0 %v1668, 14
        %v2341 = vpop.permute.xlu0 %2340
        %2342 = vrot.lane.b32.xlu0 %v1766, 14
        %v2343 = vpop.permute.xlu0 %2342
        %2344 = vrot.lane.b32.xlu0 %v1864, 14
        %v2345 = vpop.permute.xlu0 %2344
        %2378 = vrot.lane.b32.xlu0 %v417, 16
        %v2379 = vpop.permute.xlu0 %2378
        %2380 = vrot.lane.b32.xlu0 %v515, 16
        %v2381 = vpop.permute.xlu0 %2380
        %2382 = vrot.lane.b32.xlu0 %v613, 16
        %v2383 = vpop.permute.xlu0 %2382
        %2384 = vrot.lane.b32.xlu0 %v711, 16
        %v2385 = vpop.permute.xlu0 %2384
        %2386 = vrot.lane.b32.xlu0 %v809, 16
        %v2387 = vpop.permute.xlu0 %2386
        %2388 = vrot.lane.b32.xlu0 %v907, 16
        %v2389 = vpop.permute.xlu0 %2388
        %2390 = vrot.lane.b32.xlu0 %v1005, 16
        %v2391 = vpop.permute.xlu0 %2390
        %2392 = vrot.lane.b32.xlu0 %v1103, 16
        %v2393 = vpop.permute.xlu0 %2392
        %2394 = vrot.lane.b32.xlu0 %v1201, 16
        %v2395 = vpop.permute.xlu0 %2394
        %2396 = vrot.lane.b32.xlu0 %v1299, 16
        %v2397 = vpop.permute.xlu0 %2396
        %2398 = vrot.lane.b32.xlu0 %v1397, 16
        %v2399 = vpop.permute.xlu0 %2398
        %2400 = vrot.lane.b32.xlu0 %v1495, 16
        %v2401 = vpop.permute.xlu0 %2400
        %2402 = vrot.lane.b32.xlu0 %v1593, 16
        %v2403 = vpop.permute.xlu0 %2402
        %2404 = vrot.lane.b32.xlu0 %v1691, 16
        %v2405 = vpop.permute.xlu0 %2404
        %2406 = vrot.lane.b32.xlu0 %v1789, 16
        %v2407 = vpop.permute.xlu0 %2406
        %2408 = vrot.lane.b32.xlu0 %v1887, 16
        %v2409 = vpop.permute.xlu0 %2408
        %2442 = vrot.lane.b32.xlu0 %v440, 18
        %v2443 = vpop.permute.xlu0 %2442
        %2444 = vrot.lane.b32.xlu0 %v538, 18
        %v2445 = vpop.permute.xlu0 %2444
        %2446 = vrot.lane.b32.xlu0 %v636, 18
        %v2447 = vpop.permute.xlu0 %2446
        %2448 = vrot.lane.b32.xlu0 %v734, 18
        %v2449 = vpop.permute.xlu0 %2448
        %2450 = vrot.lane.b32.xlu0 %v832, 18
        %v2451 = vpop.permute.xlu0 %2450
        %2452 = vrot.lane.b32.xlu0 %v930, 18
        %v2453 = vpop.permute.xlu0 %2452
        %2454 = vrot.lane.b32.xlu0 %v1028, 18
        %v2455 = vpop.permute.xlu0 %2454
        %2456 = vrot.lane.b32.xlu0 %v1126, 18
        %v2457 = vpop.permute.xlu0 %2456
        %2458 = vrot.lane.b32.xlu0 %v1224, 18
        %v2459 = vpop.permute.xlu0 %2458
        %2460 = vrot.lane.b32.xlu0 %v1322, 18
        %v2461 = vpop.permute.xlu0 %2460
        %2462 = vrot.lane.b32.xlu0 %v1420, 18
        %v2463 = vpop.permute.xlu0 %2462
        %2464 = vrot.lane.b32.xlu0 %v1518, 18
        %v2465 = vpop.permute.xlu0 %2464
        %2466 = vrot.lane.b32.xlu0 %v1616, 18
        %v2467 = vpop.permute.xlu0 %2466
        %2468 = vrot.lane.b32.xlu0 %v1714, 18
        %v2469 = vpop.permute.xlu0 %2468
        %2470 = vrot.lane.b32.xlu0 %v1812, 18
        %v2471 = vpop.permute.xlu0 %2470
        %2472 = vrot.lane.b32.xlu0 %v1910, 18
        %v2473 = vpop.permute.xlu0 %2472
        %2506 = vrot.lane.b32.xlu0 %v424, 20
        %v2507 = vpop.permute.xlu0 %2506
        %2508 = vrot.lane.b32.xlu0 %v522, 20
        %v2509 = vpop.permute.xlu0 %2508
        %2510 = vrot.lane.b32.xlu0 %v620, 20
        %v2511 = vpop.permute.xlu0 %2510
        %2512 = vrot.lane.b32.xlu0 %v718, 20
        %v2513 = vpop.permute.xlu0 %2512
        %2514 = vrot.lane.b32.xlu0 %v816, 20
        %v2515 = vpop.permute.xlu0 %2514
        %2516 = vrot.lane.b32.xlu0 %v914, 20
        %v2517 = vpop.permute.xlu0 %2516
        %2518 = vrot.lane.b32.xlu0 %v1012, 20
        %v2519 = vpop.permute.xlu0 %2518
        %2520 = vrot.lane.b32.xlu0 %v1110, 20
        %v2521 = vpop.permute.xlu0 %2520
        %2522 = vrot.lane.b32.xlu0 %v1208, 20
        %v2523 = vpop.permute.xlu0 %2522
        %2524 = vrot.lane.b32.xlu0 %v1306, 20
        %v2525 = vpop.permute.xlu0 %2524
        %2526 = vrot.lane.b32.xlu0 %v1404, 20
        %v2527 = vpop.permute.xlu0 %2526
        %2528 = vrot.lane.b32.xlu0 %v1502, 20
        %v2529 = vpop.permute.xlu0 %2528
        %2530 = vrot.lane.b32.xlu0 %v1600, 20
        %v2531 = vpop.permute.xlu0 %2530
        %2532 = vrot.lane.b32.xlu0 %v1698, 20
        %v2533 = vpop.permute.xlu0 %2532
        %2534 = vrot.lane.b32.xlu0 %v1796, 20
        %v2535 = vpop.permute.xlu0 %2534
        %2536 = vrot.lane.b32.xlu0 %v1894, 20
        %v2537 = vpop.permute.xlu0 %2536
        %2570 = vrot.lane.b32.xlu0 %v441, 22
        %v2571 = vpop.permute.xlu0 %2570
        %2572 = vrot.lane.b32.xlu0 %v539, 22
        %v2573 = vpop.permute.xlu0 %2572
        %2574 = vrot.lane.b32.xlu0 %v637, 22
        %v2575 = vpop.permute.xlu0 %2574
        %2576 = vrot.lane.b32.xlu0 %v735, 22
        %v2577 = vpop.permute.xlu0 %2576
        %2578 = vrot.lane.b32.xlu0 %v833, 22
        %v2579 = vpop.permute.xlu0 %2578
        %2580 = vrot.lane.b32.xlu0 %v931, 22
        %v2581 = vpop.permute.xlu0 %2580
        %2582 = vrot.lane.b32.xlu0 %v1029, 22
        %v2583 = vpop.permute.xlu0 %2582
        %2584 = vrot.lane.b32.xlu0 %v1127, 22
        %v2585 = vpop.permute.xlu0 %2584
        %2586 = vrot.lane.b32.xlu0 %v1225, 22
        %v2587 = vpop.permute.xlu0 %2586
        %2588 = vrot.lane.b32.xlu0 %v1323, 22
        %v2589 = vpop.permute.xlu0 %2588
        %2590 = vrot.lane.b32.xlu0 %v1421, 22
        %v2591 = vpop.permute.xlu0 %2590
        %2592 = vrot.lane.b32.xlu0 %v1519, 22
        %v2593 = vpop.permute.xlu0 %2592
        %2594 = vrot.lane.b32.xlu0 %v1617, 22
        %v2595 = vpop.permute.xlu0 %2594
        %2596 = vrot.lane.b32.xlu0 %v1715, 22
        %v2597 = vpop.permute.xlu0 %2596
        %2598 = vrot.lane.b32.xlu0 %v1813, 22
        %v2599 = vpop.permute.xlu0 %2598
        %2600 = vrot.lane.b32.xlu0 %v1911, 22
        %v2601 = vpop.permute.xlu0 %2600
        %2634 = vrot.lane.b32.xlu0 %v432, 24
        %v2635 = vpop.permute.xlu0 %2634
        %2636 = vrot.lane.b32.xlu0 %v530, 24
        %v2637 = vpop.permute.xlu0 %2636
        %2638 = vrot.lane.b32.xlu0 %v628, 24
        %v2639 = vpop.permute.xlu0 %2638
        %2640 = vrot.lane.b32.xlu0 %v726, 24
        %v2641 = vpop.permute.xlu0 %2640
        %2642 = vrot.lane.b32.xlu0 %v824, 24
        %v2643 = vpop.permute.xlu0 %2642
        %2644 = vrot.lane.b32.xlu0 %v922, 24
        %v2645 = vpop.permute.xlu0 %2644
        %2646 = vrot.lane.b32.xlu0 %v1020, 24
        %v2647 = vpop.permute.xlu0 %2646
        %2648 = vrot.lane.b32.xlu0 %v1118, 24
        %v2649 = vpop.permute.xlu0 %2648
        %2650 = vrot.lane.b32.xlu0 %v1216, 24
        %v2651 = vpop.permute.xlu0 %2650
        %2652 = vrot.lane.b32.xlu0 %v1314, 24
        %v2653 = vpop.permute.xlu0 %2652
        %2654 = vrot.lane.b32.xlu0 %v1412, 24
        %v2655 = vpop.permute.xlu0 %2654
        %2656 = vrot.lane.b32.xlu0 %v1510, 24
        %v2657 = vpop.permute.xlu0 %2656
        %2658 = vrot.lane.b32.xlu0 %v1608, 24
        %v2659 = vpop.permute.xlu0 %2658
        %2660 = vrot.lane.b32.xlu0 %v1706, 24
        %v2661 = vpop.permute.xlu0 %2660
        %2662 = vrot.lane.b32.xlu0 %v1804, 24
        %v2663 = vpop.permute.xlu0 %2662
        %2664 = vrot.lane.b32.xlu0 %v1902, 24
        %v2665 = vpop.permute.xlu0 %2664
        %2698 = vrot.lane.b32.xlu0 %v442, 26
        %v2699 = vpop.permute.xlu0 %2698
        %2700 = vrot.lane.b32.xlu0 %v540, 26
        %v2701 = vpop.permute.xlu0 %2700
        %2702 = vrot.lane.b32.xlu0 %v638, 26
        %v2703 = vpop.permute.xlu0 %2702
        %2704 = vrot.lane.b32.xlu0 %v736, 26
        %v2705 = vpop.permute.xlu0 %2704
        %2706 = vrot.lane.b32.xlu0 %v834, 26
        %v2707 = vpop.permute.xlu0 %2706
        %2708 = vrot.lane.b32.xlu0 %v932, 26
        %v2709 = vpop.permute.xlu0 %2708
        %2710 = vrot.lane.b32.xlu0 %v1030, 26
        %v2711 = vpop.permute.xlu0 %2710
        %2712 = vrot.lane.b32.xlu0 %v1128, 26
        %v2713 = vpop.permute.xlu0 %2712
        %2714 = vrot.lane.b32.xlu0 %v1226, 26
        %v2715 = vpop.permute.xlu0 %2714
        %2716 = vrot.lane.b32.xlu0 %v1324, 26
        %v2717 = vpop.permute.xlu0 %2716
        %2718 = vrot.lane.b32.xlu0 %v1422, 26
        %v2719 = vpop.permute.xlu0 %2718
        %2720 = vrot.lane.b32.xlu0 %v1520, 26
        %v2721 = vpop.permute.xlu0 %2720
        %2722 = vrot.lane.b32.xlu0 %v1618, 26
        %v2723 = vpop.permute.xlu0 %2722
        %2724 = vrot.lane.b32.xlu0 %v1716, 26
        %v2725 = vpop.permute.xlu0 %2724
        %2726 = vrot.lane.b32.xlu0 %v1814, 26
        %v2727 = vpop.permute.xlu0 %2726
        %2728 = vrot.lane.b32.xlu0 %v1912, 26
        %v2729 = vpop.permute.xlu0 %2728
        %2762 = vrot.lane.b32.xlu0 %v439, 28
        %v2763 = vpop.permute.xlu0 %2762
        %2764 = vrot.lane.b32.xlu0 %v537, 28
        %v2765 = vpop.permute.xlu0 %2764
        %2766 = vrot.lane.b32.xlu0 %v635, 28
        %v2767 = vpop.permute.xlu0 %2766
        %2768 = vrot.lane.b32.xlu0 %v733, 28
        %v2769 = vpop.permute.xlu0 %2768
        %2770 = vrot.lane.b32.xlu0 %v831, 28
        %v2771 = vpop.permute.xlu0 %2770
        %2772 = vrot.lane.b32.xlu0 %v929, 28
        %v2773 = vpop.permute.xlu0 %2772
        %2774 = vrot.lane.b32.xlu0 %v1027, 28
        %v2775 = vpop.permute.xlu0 %2774
        %2776 = vrot.lane.b32.xlu0 %v1125, 28
        %v2777 = vpop.permute.xlu0 %2776
        %2778 = vrot.lane.b32.xlu0 %v1223, 28
        %v2779 = vpop.permute.xlu0 %2778
        %2780 = vrot.lane.b32.xlu0 %v1321, 28
        %v2781 = vpop.permute.xlu0 %2780
        %2782 = vrot.lane.b32.xlu0 %v1419, 28
        %v2783 = vpop.permute.xlu0 %2782
        %2784 = vrot.lane.b32.xlu0 %v1517, 28
        %v2785 = vpop.permute.xlu0 %2784
        %2786 = vrot.lane.b32.xlu0 %v1615, 28
        %v2787 = vpop.permute.xlu0 %2786
        %2788 = vrot.lane.b32.xlu0 %v1713, 28
        %v2789 = vpop.permute.xlu0 %2788
        %2790 = vrot.lane.b32.xlu0 %v1811, 28
        %v2791 = vpop.permute.xlu0 %2790
        %2792 = vrot.lane.b32.xlu0 %v1909, 28
        %v2793 = vpop.permute.xlu0 %2792
        %2826 = vrot.lane.b32.xlu0 %v443, 30
        %v2827 = vpop.permute.xlu0 %2826
        %2828 = vrot.lane.b32.xlu0 %v541, 30
        %v2829 = vpop.permute.xlu0 %2828
        %2830 = vrot.lane.b32.xlu0 %v639, 30
        %v2831 = vpop.permute.xlu0 %2830
        %2832 = vrot.lane.b32.xlu0 %v737, 30
        %v2833 = vpop.permute.xlu0 %2832
        %2834 = vrot.lane.b32.xlu0 %v835, 30
        %v2835 = vpop.permute.xlu0 %2834
        %2836 = vrot.lane.b32.xlu0 %v933, 30
        %v2837 = vpop.permute.xlu0 %2836
        %2838 = vrot.lane.b32.xlu0 %v1031, 30
        %v2839 = vpop.permute.xlu0 %2838
        %2840 = vrot.lane.b32.xlu0 %v1129, 30
        %v2841 = vpop.permute.xlu0 %2840
        %2842 = vrot.lane.b32.xlu0 %v1227, 30
        %v2843 = vpop.permute.xlu0 %2842
        %2844 = vrot.lane.b32.xlu0 %v1325, 30
        %v2845 = vpop.permute.xlu0 %2844
        %2846 = vrot.lane.b32.xlu0 %v1423, 30
        %v2847 = vpop.permute.xlu0 %2846
        %2848 = vrot.lane.b32.xlu0 %v1521, 30
        %v2849 = vpop.permute.xlu0 %2848
        %2850 = vrot.lane.b32.xlu0 %v1619, 30
        %v2851 = vpop.permute.xlu0 %2850
        %2852 = vrot.lane.b32.xlu0 %v1717, 30
        %v2853 = vpop.permute.xlu0 %2852
        %2854 = vrot.lane.b32.xlu0 %v1815, 30
        %v2855 = vpop.permute.xlu0 %2854
        %2856 = vrot.lane.b32.xlu0 %v1913, 30
        %v2857 = vpop.permute.xlu0 %2856
        %vm2874 = vcmask 15360
        %v2875 = vsel %vm2874, %v368, %v1931
        %v2876 = vsel %vm2874, %v466, %v1933
        %v2877 = vsel %vm2874, %v564, %v1935
        %v2878 = vsel %vm2874, %v662, %v1937
        %v2879 = vsel %vm2874, %v760, %v1939
        %v2880 = vsel %vm2874, %v858, %v1941
        %v2881 = vsel %vm2874, %v956, %v1943
        %v2882 = vsel %vm2874, %v1054, %v1945
        %v2883 = vsel %vm2874, %v1152, %v1947
        %v2884 = vsel %vm2874, %v1250, %v1949
        %v2885 = vsel %vm2874, %v1348, %v1951
        %v2886 = vsel %vm2874, %v1446, %v1953
        %v2887 = vsel %vm2874, %v1544, %v1955
        %v2888 = vsel %vm2874, %v1642, %v1957
        %v2889 = vsel %vm2874, %v1740, %v1959
        %v2890 = vsel %vm2874, %v1838, %v1961
        %vm2891 = vcmask 31744
        %v2892 = vsel %vm2891, %v2875, %v1995
        %v2893 = vsel %vm2891, %v2876, %v1997
        %v2894 = vsel %vm2891, %v2877, %v1999
        %v2895 = vsel %vm2891, %v2878, %v2001
        %v2896 = vsel %vm2891, %v2879, %v2003
        %v2897 = vsel %vm2891, %v2880, %v2005
        %v2898 = vsel %vm2891, %v2881, %v2007
        %v2899 = vsel %vm2891, %v2882, %v2009
        %v2900 = vsel %vm2891, %v2883, %v2011
        %v2901 = vsel %vm2891, %v2884, %v2013
        %v2902 = vsel %vm2891, %v2885, %v2015
        %v2903 = vsel %vm2891, %v2886, %v2017
        %v2904 = vsel %vm2891, %v2887, %v2019
        %v2905 = vsel %vm2891, %v2888, %v2021
        %v2906 = vsel %vm2891, %v2889, %v2023
        %v2907 = vsel %vm2891, %v2890, %v2025
        %vm2908 = vcmask 48128
        %v2909 = vsel %vm2908, %v2892, %v2059
        %v2910 = vsel %vm2908, %v2893, %v2061
        %v2911 = vsel %vm2908, %v2894, %v2063
        %v2912 = vsel %vm2908, %v2895, %v2065
        %v2913 = vsel %vm2908, %v2896, %v2067
        %v2914 = vsel %vm2908, %v2897, %v2069
        %v2915 = vsel %vm2908, %v2898, %v2071
        %v2916 = vsel %vm2908, %v2899, %v2073
        %v2917 = vsel %vm2908, %v2900, %v2075
        %v2918 = vsel %vm2908, %v2901, %v2077
        %v2919 = vsel %vm2908, %v2902, %v2079
        %v2920 = vsel %vm2908, %v2903, %v2081
        %v2921 = vsel %vm2908, %v2904, %v2083
        %v2922 = vsel %vm2908, %v2905, %v2085
        %v2923 = vsel %vm2908, %v2906, %v2087
        %v2924 = vsel %vm2908, %v2907, %v2089
        %vm2925 = vcmask 64512
        %v2926 = vsel %vm2925, %v2909, %v2123
        %v2927 = vsel %vm2925, %v2910, %v2125
        %v2928 = vsel %vm2925, %v2911, %v2127
        %v2929 = vsel %vm2925, %v2912, %v2129
        %v2930 = vsel %vm2925, %v2913, %v2131
        %v2931 = vsel %vm2925, %v2914, %v2133
        %v2932 = vsel %vm2925, %v2915, %v2135
        %v2933 = vsel %vm2925, %v2916, %v2137
        %v2934 = vsel %vm2925, %v2917, %v2139
        %v2935 = vsel %vm2925, %v2918, %v2141
        %v2936 = vsel %vm2925, %v2919, %v2143
        %v2937 = vsel %vm2925, %v2920, %v2145
        %v2938 = vsel %vm2925, %v2921, %v2147
        %v2939 = vsel %vm2925, %v2922, %v2149
        %v2940 = vsel %vm2925, %v2923, %v2151
        %v2941 = vsel %vm2925, %v2924, %v2153
        %vm2942 = vcmask 80896
        %v2943 = vsel %vm2942, %v2926, %v2187
        %v2944 = vsel %vm2942, %v2927, %v2189
        %v2945 = vsel %vm2942, %v2928, %v2191
        %v2946 = vsel %vm2942, %v2929, %v2193
        %v2947 = vsel %vm2942, %v2930, %v2195
        %v2948 = vsel %vm2942, %v2931, %v2197
        %v2949 = vsel %vm2942, %v2932, %v2199
        %v2950 = vsel %vm2942, %v2933, %v2201
        %v2951 = vsel %vm2942, %v2934, %v2203
        %v2952 = vsel %vm2942, %v2935, %v2205
        %v2953 = vsel %vm2942, %v2936, %v2207
        %v2954 = vsel %vm2942, %v2937, %v2209
        %v2955 = vsel %vm2942, %v2938, %v2211
        %v2956 = vsel %vm2942, %v2939, %v2213
        %v2957 = vsel %vm2942, %v2940, %v2215
        %v2958 = vsel %vm2942, %v2941, %v2217
        %vm2959 = vcmask 97280
        %v2960 = vsel %vm2959, %v2943, %v2251
        %v2961 = vsel %vm2959, %v2944, %v2253
        %v2962 = vsel %vm2959, %v2945, %v2255
        %v2963 = vsel %vm2959, %v2946, %v2257
        %v2964 = vsel %vm2959, %v2947, %v2259
        %v2965 = vsel %vm2959, %v2948, %v2261
        %v2966 = vsel %vm2959, %v2949, %v2263
        %v2967 = vsel %vm2959, %v2950, %v2265
        %v2968 = vsel %vm2959, %v2951, %v2267
        %v2969 = vsel %vm2959, %v2952, %v2269
        %v2970 = vsel %vm2959, %v2953, %v2271
        %v2971 = vsel %vm2959, %v2954, %v2273
        %v2972 = vsel %vm2959, %v2955, %v2275
        %v2973 = vsel %vm2959, %v2956, %v2277
        %v2974 = vsel %vm2959, %v2957, %v2279
        %v2975 = vsel %vm2959, %v2958, %v2281
        %vm2976 = vcmask 113664
        %v2977 = vsel %vm2976, %v2960, %v2315
        %v2978 = vsel %vm2976, %v2961, %v2317
        %v2979 = vsel %vm2976, %v2962, %v2319
        %v2980 = vsel %vm2976, %v2963, %v2321
        %v2981 = vsel %vm2976, %v2964, %v2323
        %v2982 = vsel %vm2976, %v2965, %v2325
        %v2983 = vsel %vm2976, %v2966, %v2327
        %v2984 = vsel %vm2976, %v2967, %v2329
        %v2985 = vsel %vm2976, %v2968, %v2331
        %v2986 = vsel %vm2976, %v2969, %v2333
        %v2987 = vsel %vm2976, %v2970, %v2335
        %v2988 = vsel %vm2976, %v2971, %v2337
        %v2989 = vsel %vm2976, %v2972, %v2339
        %v2990 = vsel %vm2976, %v2973, %v2341
        %v2991 = vsel %vm2976, %v2974, %v2343
        %v2992 = vsel %vm2976, %v2975, %v2345
        %vm2993 = vcmask 130048
        %v2994 = vsel %vm2993, %v2977, %v2379
        %v2995 = vsel %vm2993, %v2978, %v2381
        %v2996 = vsel %vm2993, %v2979, %v2383
        %v2997 = vsel %vm2993, %v2980, %v2385
        %v2998 = vsel %vm2993, %v2981, %v2387
        %v2999 = vsel %vm2993, %v2982, %v2389
        %v3000 = vsel %vm2993, %v2983, %v2391
        %v3001 = vsel %vm2993, %v2984, %v2393
        %v3002 = vsel %vm2993, %v2985, %v2395
        %v3003 = vsel %vm2993, %v2986, %v2397
        %v3004 = vsel %vm2993, %v2987, %v2399
        %v3005 = vsel %vm2993, %v2988, %v2401
        %v3006 = vsel %vm2993, %v2989, %v2403
        %v3007 = vsel %vm2993, %v2990, %v2405
        %v3008 = vsel %vm2993, %v2991, %v2407
        %v3009 = vsel %vm2993, %v2992, %v2409
        %vm3010 = vcmask 146432
        %v3011 = vsel %vm3010, %v2994, %v2443
        %v3012 = vsel %vm3010, %v2995, %v2445
        %v3013 = vsel %vm3010, %v2996, %v2447
        %v3014 = vsel %vm3010, %v2997, %v2449
        %v3015 = vsel %vm3010, %v2998, %v2451
        %v3016 = vsel %vm3010, %v2999, %v2453
        %v3017 = vsel %vm3010, %v3000, %v2455
        %v3018 = vsel %vm3010, %v3001, %v2457
        %v3019 = vsel %vm3010, %v3002, %v2459
        %v3020 = vsel %vm3010, %v3003, %v2461
        %v3021 = vsel %vm3010, %v3004, %v2463
        %v3022 = vsel %vm3010, %v3005, %v2465
        %v3023 = vsel %vm3010, %v3006, %v2467
        %v3024 = vsel %vm3010, %v3007, %v2469
        %v3025 = vsel %vm3010, %v3008, %v2471
        %v3026 = vsel %vm3010, %v3009, %v2473
        %vm3027 = vcmask 162816
        %v3028 = vsel %vm3027, %v3011, %v2507
        %v3029 = vsel %vm3027, %v3012, %v2509
        %v3030 = vsel %vm3027, %v3013, %v2511
        %v3031 = vsel %vm3027, %v3014, %v2513
        %v3032 = vsel %vm3027, %v3015, %v2515
        %v3033 = vsel %vm3027, %v3016, %v2517
        %v3034 = vsel %vm3027, %v3017, %v2519
        %v3035 = vsel %vm3027, %v3018, %v2521
        %v3036 = vsel %vm3027, %v3019, %v2523
        %v3037 = vsel %vm3027, %v3020, %v2525
        %v3038 = vsel %vm3027, %v3021, %v2527
        %v3039 = vsel %vm3027, %v3022, %v2529
        %v3040 = vsel %vm3027, %v3023, %v2531
        %v3041 = vsel %vm3027, %v3024, %v2533
        %v3042 = vsel %vm3027, %v3025, %v2535
        %v3043 = vsel %vm3027, %v3026, %v2537
        %vm3044 = vcmask 179200
        %v3045 = vsel %vm3044, %v3028, %v2571
        %v3046 = vsel %vm3044, %v3029, %v2573
        %v3047 = vsel %vm3044, %v3030, %v2575
        %v3048 = vsel %vm3044, %v3031, %v2577
        %v3049 = vsel %vm3044, %v3032, %v2579
        %v3050 = vsel %vm3044, %v3033, %v2581
        %v3051 = vsel %vm3044, %v3034, %v2583
        %v3052 = vsel %vm3044, %v3035, %v2585
        %v3053 = vsel %vm3044, %v3036, %v2587
        %v3054 = vsel %vm3044, %v3037, %v2589
        %v3055 = vsel %vm3044, %v3038, %v2591
        %v3056 = vsel %vm3044, %v3039, %v2593
        %v3057 = vsel %vm3044, %v3040, %v2595
        %v3058 = vsel %vm3044, %v3041, %v2597
        %v3059 = vsel %vm3044, %v3042, %v2599
        %v3060 = vsel %vm3044, %v3043, %v2601
        %vm3061 = vcmask 195584
        %v3062 = vsel %vm3061, %v3045, %v2635
        %v3063 = vsel %vm3061, %v3046, %v2637
        %v3064 = vsel %vm3061, %v3047, %v2639
        %v3065 = vsel %vm3061, %v3048, %v2641
        %v3066 = vsel %vm3061, %v3049, %v2643
        %v3067 = vsel %vm3061, %v3050, %v2645
        %v3068 = vsel %vm3061, %v3051, %v2647
        %v3069 = vsel %vm3061, %v3052, %v2649
        %v3070 = vsel %vm3061, %v3053, %v2651
        %v3071 = vsel %vm3061, %v3054, %v2653
        %v3072 = vsel %vm3061, %v3055, %v2655
        %v3073 = vsel %vm3061, %v3056, %v2657
        %v3074 = vsel %vm3061, %v3057, %v2659
        %v3075 = vsel %vm3061, %v3058, %v2661
        %v3076 = vsel %vm3061, %v3059, %v2663
        %v3077 = vsel %vm3061, %v3060, %v2665
        %vm3078 = vcmask 211968
        %v3079 = vsel %vm3078, %v3062, %v2699
        %v3080 = vsel %vm3078, %v3063, %v2701
        %v3081 = vsel %vm3078, %v3064, %v2703
        %v3082 = vsel %vm3078, %v3065, %v2705
        %v3083 = vsel %vm3078, %v3066, %v2707
        %v3084 = vsel %vm3078, %v3067, %v2709
        %v3085 = vsel %vm3078, %v3068, %v2711
        %v3086 = vsel %vm3078, %v3069, %v2713
        %v3087 = vsel %vm3078, %v3070, %v2715
        %v3088 = vsel %vm3078, %v3071, %v2717
        %v3089 = vsel %vm3078, %v3072, %v2719
        %v3090 = vsel %vm3078, %v3073, %v2721
        %v3091 = vsel %vm3078, %v3074, %v2723
        %v3092 = vsel %vm3078, %v3075, %v2725
        %v3093 = vsel %vm3078, %v3076, %v2727
        %v3094 = vsel %vm3078, %v3077, %v2729
        %vm3095 = vcmask 228352
        %v3096 = vsel %vm3095, %v3079, %v2763
        %v3097 = vsel %vm3095, %v3080, %v2765
        %v3098 = vsel %vm3095, %v3081, %v2767
        %v3099 = vsel %vm3095, %v3082, %v2769
        %v3100 = vsel %vm3095, %v3083, %v2771
        %v3101 = vsel %vm3095, %v3084, %v2773
        %v3102 = vsel %vm3095, %v3085, %v2775
        %v3103 = vsel %vm3095, %v3086, %v2777
        %v3104 = vsel %vm3095, %v3087, %v2779
        %v3105 = vsel %vm3095, %v3088, %v2781
        %v3106 = vsel %vm3095, %v3089, %v2783
        %v3107 = vsel %vm3095, %v3090, %v2785
        %v3108 = vsel %vm3095, %v3091, %v2787
        %v3109 = vsel %vm3095, %v3092, %v2789
        %v3110 = vsel %vm3095, %v3093, %v2791
        %v3111 = vsel %vm3095, %v3094, %v2793
        %vm3112 = vcmask 244736
        %v3113 = vsel %vm3112, %v3096, %v2827
        %v3114 = vsel %vm3112, %v3097, %v2829
        %v3115 = vsel %vm3112, %v3098, %v2831
        %v3116 = vsel %vm3112, %v3099, %v2833
        %v3117 = vsel %vm3112, %v3100, %v2835
        %v3118 = vsel %vm3112, %v3101, %v2837
        %v3119 = vsel %vm3112, %v3102, %v2839
        %v3120 = vsel %vm3112, %v3103, %v2841
        %v3121 = vsel %vm3112, %v3104, %v2843
        %v3122 = vsel %vm3112, %v3105, %v2845
        %v3123 = vsel %vm3112, %v3106, %v2847
        %v3124 = vsel %vm3112, %v3107, %v2849
        %v3125 = vsel %vm3112, %v3108, %v2851
        %v3126 = vsel %vm3112, %v3109, %v2853
        %v3127 = vsel %vm3112, %v3110, %v2855
        %v3128 = vsel %vm3112, %v3111, %v2857
        %v3129 = vlaneseq
        %v3130 = vshrl.u32 %v3129, 7
        %v3131 = vsub.s32 0, %v3130
        %v3132 = vrot.slane %v3113, %v3131
        %v3133 = vlaneseq
        %v3134 = vshrl.u32 %v3133, 7
        %v3135 = vsub.s32 0, %v3134
        %v3136 = vrot.slane %v3114, %v3135
        %v3137 = vlaneseq
        %v3138 = vshrl.u32 %v3137, 7
        %v3139 = vsub.s32 0, %v3138
        %v3140 = vrot.slane %v3115, %v3139
        %v3141 = vlaneseq
        %v3142 = vshrl.u32 %v3141, 7
        %v3143 = vsub.s32 0, %v3142
        %v3144 = vrot.slane %v3116, %v3143
        %v3145 = vlaneseq
        %v3146 = vshrl.u32 %v3145, 7
        %v3147 = vsub.s32 0, %v3146
        %v3148 = vrot.slane %v3117, %v3147
        %v3149 = vlaneseq
        %v3150 = vshrl.u32 %v3149, 7
        %v3151 = vsub.s32 0, %v3150
        %v3152 = vrot.slane %v3118, %v3151
        %v3153 = vlaneseq
        %v3154 = vshrl.u32 %v3153, 7
        %v3155 = vsub.s32 0, %v3154
        %v3156 = vrot.slane %v3119, %v3155
        %v3157 = vlaneseq
        %v3158 = vshrl.u32 %v3157, 7
        %v3159 = vsub.s32 0, %v3158
        %v3160 = vrot.slane %v3120, %v3159
        %v3161 = vlaneseq
        %v3162 = vshrl.u32 %v3161, 7
        %v3163 = vsub.s32 0, %v3162
        %v3164 = vrot.slane %v3121, %v3163
        %v3165 = vlaneseq
        %v3166 = vshrl.u32 %v3165, 7
        %v3167 = vsub.s32 0, %v3166
        %v3168 = vrot.slane %v3122, %v3167
        %v3169 = vlaneseq
        %v3170 = vshrl.u32 %v3169, 7
        %v3171 = vsub.s32 0, %v3170
        %v3172 = vrot.slane %v3123, %v3171
        %v3173 = vlaneseq
        %v3174 = vshrl.u32 %v3173, 7
        %v3175 = vsub.s32 0, %v3174
        %v3176 = vrot.slane %v3124, %v3175
        %v3177 = vlaneseq
        %v3178 = vshrl.u32 %v3177, 7
        %v3179 = vsub.s32 0, %v3178
        %v3180 = vrot.slane %v3125, %v3179
        %v3181 = vlaneseq
        %v3182 = vshrl.u32 %v3181, 7
        %v3183 = vsub.s32 0, %v3182
        %v3184 = vrot.slane %v3126, %v3183
        %v3185 = vlaneseq
        %v3186 = vshrl.u32 %v3185, 7
        %v3187 = vsub.s32 0, %v3186
        %v3188 = vrot.slane %v3127, %v3187
        %v3189 = vlaneseq
        %v3190 = vshrl.u32 %v3189, 7
        %v3191 = vsub.s32 0, %v3190
        %v3192 = vrot.slane %v3128, %v3191
        %v3193 = vcombine.low %v3132, %v3140
        %v3195 = vunpack.c.l.s4 1983009808
        %v3196 = vunpack.c.0.s8 %v3195
        %v3197 = vlaneseq
        %v3198 = vshrl.u32 %v3197, 7
        %v3199 = vsub.s32 %v3196, %v3198
        %v3200 = vrot.slane %v3193, %v3199
        %v3201 = vcombine.low %v3136, %v3144
        %v3203 = vunpack.c.l.s4 1983009808
        %v3204 = vunpack.c.0.s8 %v3203
        %v3205 = vlaneseq
        %v3206 = vshrl.u32 %v3205, 7
        %v3207 = vsub.s32 %v3204, %v3206
        %v3208 = vrot.slane %v3201, %v3207
        %v3209 = vcombine.low %v3148, %v3156
        %v3211 = vunpack.c.l.s4 1983009808
        %v3212 = vunpack.c.0.s8 %v3211
        %v3213 = vlaneseq
        %v3214 = vshrl.u32 %v3213, 7
        %v3215 = vsub.s32 %v3212, %v3214
        %v3216 = vrot.slane %v3209, %v3215
        %v3217 = vcombine.low %v3152, %v3160
        %v3219 = vunpack.c.l.s4 1983009808
        %v3220 = vunpack.c.0.s8 %v3219
        %v3221 = vlaneseq
        %v3222 = vshrl.u32 %v3221, 7
        %v3223 = vsub.s32 %v3220, %v3222
        %v3224 = vrot.slane %v3217, %v3223
        %v3225 = vcombine.low %v3200, %v3208
        %v3227 = vunpack.c.l.s4 1934713408
        %v3228 = vunpack.c.0.s8 %v3227
        %v3229 = vlaneseq
        %v3230 = vshrl.u32 %v3229, 7
        %v3231 = vsub.s32 %v3228, %v3230
        %v3232 = vrot.slane %v3225, %v3231
        %v3233 = vcombine.low %v3216, %v3224
        %v3235 = vunpack.c.l.s4 1934713408
        %v3236 = vunpack.c.0.s8 %v3235
        %v3237 = vlaneseq
        %v3238 = vshrl.u32 %v3237, 7
        %v3239 = vsub.s32 %v3236, %v3238
        %v3240 = vrot.slane %v3233, %v3239
        %v3241 = vcombine.low %v3232, %v3240
        %v3242 = vcombine.high %v3232, %v3240
        %v3243 = vcombine.low %v3164, %v3172
        %v3245 = vunpack.c.l.s4 1983009808
        %v3246 = vunpack.c.0.s8 %v3245
        %v3247 = vlaneseq
        %v3248 = vshrl.u32 %v3247, 7
        %v3249 = vsub.s32 %v3246, %v3248
        %v3250 = vrot.slane %v3243, %v3249
        %v3251 = vcombine.low %v3168, %v3176
        %v3253 = vunpack.c.l.s4 1983009808
        %v3254 = vunpack.c.0.s8 %v3253
        %v3255 = vlaneseq
        %v3256 = vshrl.u32 %v3255, 7
        %v3257 = vsub.s32 %v3254, %v3256
        %v3258 = vrot.slane %v3251, %v3257
        %v3259 = vcombine.low %v3180, %v3188
        %v3261 = vunpack.c.l.s4 1983009808
        %v3262 = vunpack.c.0.s8 %v3261
        %v3263 = vlaneseq
        %v3264 = vshrl.u32 %v3263, 7
        %v3265 = vsub.s32 %v3262, %v3264
        %v3266 = vrot.slane %v3259, %v3265
        %v3267 = vcombine.low %v3184, %v3192
        %v3269 = vunpack.c.l.s4 1983009808
        %v3270 = vunpack.c.0.s8 %v3269
        %v3271 = vlaneseq
        %v3272 = vshrl.u32 %v3271, 7
        %v3273 = vsub.s32 %v3270, %v3272
        %v3274 = vrot.slane %v3267, %v3273
        %v3275 = vcombine.low %v3250, %v3258
        %v3277 = vunpack.c.l.s4 1934713408
        %v3278 = vunpack.c.0.s8 %v3277
        %v3279 = vlaneseq
        %v3280 = vshrl.u32 %v3279, 7
        %v3281 = vsub.s32 %v3278, %v3280
        %v3282 = vrot.slane %v3275, %v3281
        %v3283 = vcombine.low %v3266, %v3274
        %v3285 = vunpack.c.l.s4 1934713408
        %v3286 = vunpack.c.0.s8 %v3285
        %v3287 = vlaneseq
        %v3288 = vshrl.u32 %v3287, 7
        %v3289 = vsub.s32 %v3286, %v3288
        %v3290 = vrot.slane %v3283, %v3289
        %v3291 = vcombine.low %v3282, %v3290
        %v3292 = vcombine.high %v3282, %v3290
        %3295 = vrot.lane.b32.xlu0 %v3242, 32
        %v3296 = vpop.permute.xlu0 %3295
        %3297 = vrot.lane.b32.xlu0 %v3292, 32
        %v3298 = vpop.permute.xlu0 %3297
        %vm3301 = vcmask 261120
        %v3302 = vsel %vm3301, %v3241, %v3296
        %v3303 = vsel %vm3301, %v3291, %v3298
        %vm3304 = vcmask 523264
        %3305 = vst.msk [vmem:[%s165] sm:$0xff] %vm3304, %v3302
        %3306 = vst.msk [vmem:[%s165 + $0x8] sm:$0xff] %vm3304, %v3303
        %s3307 = sand.u32 %s79, 1
        %s3308 = scalar_lea.sflag [#allocation4], %s3307
        %s3309 = sand.u32 %s79, 1
        %s3310 = smul.addr %s3309, 16
        %s3311 = scalar_lea.vmem [#allocation5], %s3310
        // Predicated region
        $region29: #{tpu_custom_call.1} parent=23 // pred_check
          %p3312 = pneg %p89
        $region30: #{tpu_custom_call.1} parent=23 // pred_check_branch
          %3314 = sbr.rel (%p3312) target = $region32
        $region31: #{tpu_custom_call.1} parent=23 // pred_region
          %s3315 = smul.u32 2, %s24
          %s3317 = ssub.s32 256, 256
          %3318 = vsyncadd %s3308, %s3317
          %s3319 = smul.addr %s3315, 2
          %s3320 = sadd.s32 %s25, %s3319
          %s3321 = smul.addr %s23, 8
          %s3322 = sadd.s32 %s3320, %s3321
          %s3323 = smul.addr %s3322, 128
          %s3324 = scalar_lea.hbm %s1, %s3323
          %s3325 = sshll.u32 %s3311, 4
          %s3326 = int_to_ptr.vmem [resolvable:$true] %s3325
          %3331 = dma.vmem_to_hbm [thread:$0]  %s3326, 256, %s3324, %s3308, 128, 256, 8
        $region32: #{tpu_custom_call.1} parent=23 // pred_fallthru
          _
      $region24: #{tpu_custom_call.1} parent=5 // pred_fallthru
        _
      %p3332 = scmp.le.s32.totalorder 2, %s13
      // Predicated region
      $region33: #{tpu_custom_call.1} parent=5 // pred_check
        %p3333 = pneg %p3332
      $region34: #{tpu_custom_call.1} parent=5 // pred_check_branch
        %3335 = sbr.rel (%p3333) target = $region36
      $region35: #{tpu_custom_call.1} parent=5 // pred_region
        %s3336 = ssub.s32 %s13, 2
        // Predicated region
        $region37: #{tpu_custom_call.1} parent=35 // pred_check
          %p3337 = pneg %p95
        $region38: #{tpu_custom_call.1} parent=35 // pred_check_branch
          %3339 = sbr.rel (%p3337) target = $region40
        $region39: #{tpu_custom_call.1} parent=35 // pred_region
          %s3340 = sand.u32 %s80, 1
          %s3341 = scalar_lea.sflag [#allocation4], %s3340
          %s3342 = sand.u32 %s80, 1
          %s3343 = smul.addr %s3342, 16
          %s3344 = scalar_lea.vmem [#allocation5], %s3343
          %3345 = dma.done %s3341, 256
        $region40: #{tpu_custom_call.1} parent=35 // pred_fallthru
          _
      $region36: #{tpu_custom_call.1} parent=5 // pred_fallthru
        _
    $region6: #{tpu_custom_call.1} parent=1 // loop_footer
      %s17 = sadd.s32 1, %s13
    $region7: #{tpu_custom_call.1} parent=1 // loop_footer_branch
      %12 = sbr.rel target = $region3
    $region8: #{tpu_custom_call.1} parent=1 // loop_exit
      _
    %3346 = vsyncpa [#allocation3], 1
    %s3347 = scalar_lea.sflag [#allocation3], 1
    %3348 = vsyncpa %s3347, 1
    %3349 = vsyncpa [#allocation4], 1
    %s3350 = scalar_lea.sflag [#allocation4], 1
    %3351 = vsyncpa %s3350, 1

</llo_original>
